<compile_context>
chip_gen: v7x
topology: tpu7x:2x2x1
jax: 0.10.0
libtpu: 0.0.40
codegen_flags: <defaults>
</compile_context>

<pallas_src>
import functools
import types

import numpy as np
import jax
import jax.numpy as jnp
from jax.experimental import pallas as pl
from jax.experimental.pallas import tpu as pltpu

_SQRT_HALF = 0.7071067811865476


def _gelu(x):
    # exact GELU (matches torch.nn.GELU default)
    return 0.5 * x * (1.0 + jax.lax.erf(x * _SQRT_HALF))


def _mix(x, w):
    """Channel mix on the VPU: x (Cin, L), w (Cout, Cin) -> (Cout, L).

    Cin/Cout are tiny static ints (1-8), so an unrolled broadcast-MAC keeps all
    lanes busy instead of pushing a nearly empty matmul through the MXU.
    """
    cin = x.shape[0]
    acc = w[:, 0:1] * x[0:1, :]
    for ci in range(1, cin):
        acc = acc + w[:, ci:ci + 1] * x[ci:ci + 1, :]
    return acc


def _line_geom(HW, W, K):
    """Geometry of the zero-margined scratch line used for KxK 'same' convs."""
    p = K // 2
    need = p * W + p                       # max |flat shift|
    off = -(-need // 128) * 128            # lane-aligned start of the image data
    return off, off + HW + off


def _make_col_masks(HW, W, p):
    """Lane masks that kill taps which would wrap across image rows."""
    col = jax.lax.broadcasted_iota(jnp.int32, (1, HW), 1) % W
    return {dw: jnp.logical_and(col + dw >= 0, col + dw < W)
            for dw in range(-p, p + 1) if dw}


def _conv_same(x, wt_ref, pad_ref, W, K, wmask):
    """KxK 'same' conv (stride 1, zero pad K//2) in flattened-spatial layout.

    x:       (Cin, H*W) activation value (spatial flattened on lanes).
    wt_ref:  (K*K, Cout, Cin) per-tap channel-mix weights (tap = kh*K + kw).
    pad_ref: VMEM scratch (Cin, off + H*W + off) with zeroed margins; every tap
             is then a static lane-slice load -- no HBM im2col, no roll.
    wmask:   precomputed column masks (shared by every conv of the same K/W).
    """
    HW = x.shape[1]
    p = K // 2
    off, _ = _line_geom(HW, W, K)

    pad_ref[:, off:off + HW] = x           # interior only; margins stay zero

    acc = None
    for kh in range(K):
        for kw in range(K):
            dh, dw = kh - p, kw - p
            s = dh * W + dw
            xs = pad_ref[:, off + s: off + s + HW]
            if dw:
                xs = jnp.where(wmask[dw], xs, 0.0)
            c = _mix(xs, wt_ref[kh * K + kw])
            acc = c if acc is None else acc + c
    return acc


# ------------------------------- Pallas kernels ------------------------------ #

def _stem_kernel(x_ref, w_ref, b_ref, o_ref, pad_ref, *, W, K):
    # x_ref: (Cin, HW), w_ref: (K*K, Cout, Cin), b_ref: (Cout, 1), o_ref: (Cout, HW)
    pad_ref[...] = jnp.zeros_like(pad_ref)         # zero margins once
    x = x_ref[...]
    wmask = _make_col_masks(x.shape[1], W, K // 2)
    o_ref[...] = _conv_same(x, w_ref, pad_ref, W, K, wmask) + b_ref[...]


def _block_kernel(x_ref, w1_ref, b1_ref, w2_ref, b2_ref, w3_ref, b3_ref,
                  w4_ref, b4_ref, *rest, W, pool_k, has_proj):
    pad_ref = rest[-1]
    o_ref = rest[-2]
    extras = rest[:-2]
    i = 0
    if has_proj:
        wp_ref, bp_ref = extras[0], extras[1]
        i = 2
    if pool_k:
        pmat_ref = extras[i]

    pad_ref[...] = jnp.zeros_like(pad_ref)         # zero margins once per block
    x = x_ref[...]                                 # (Cin, HW)
    wmask = _make_col_masks(x.shape[1], W, 1)      # shared by both 3x3 convs

    h = _mix(_gelu(x), w1_ref[...]) + b1_ref[...]                    # 1x1: (Cb, HW)
    h = _conv_same(_gelu(h), w2_ref, pad_ref, W, 3, wmask) + b2_ref[...]
    h = _conv_same(_gelu(h), w3_ref, pad_ref, W, 3, wmask) + b3_ref[...]
    h = _mix(_gelu(h), w4_ref[...]) + b4_ref[...]                    # 1x1: (Cw, HW)

    r = (_mix(x, wp_ref[...]) + bp_ref[...]) if has_proj else x
    out = h + r
    if pool_k:
        # avg_pool2d(k, stride=k) fused as a matmul with a constant pooling matrix
        out = jnp.dot(out, pmat_ref[...], preferred_element_type=jnp.float32)
    o_ref[...] = out


# ------------------------------ kernel wrappers ------------------------------ #

def _full_spec(a):
    nd = a.ndim
    return pl.BlockSpec(tuple(a.shape), lambda n, _nd=nd: (0,) * _nd)


@functools.lru_cache(maxsize=None)
def _pool_matrix_np(H, W, k):
    Ho, Wo = H // k, W // k
    P = np.zeros((H * W, Ho * Wo), np.float32)
    inv = 1.0 / (k * k)
    for h in range(Ho * k):
        for w in range(Wo * k):
            P[h * W + w, (h // k) * Wo + (w // k)] = inv
    return P


def stem_forward(params, x_nchw):
    N, Cin, H, W = x_nchw.shape
    wt, b = params["stem_w"], params["stem_b"]     # (49, Cout, Cin), (Cout, 1)
    Cout = wt.shape[1]
    K = 7
    HW = H * W
    xf = x_nchw.reshape(N, Cin, HW).astype(jnp.float32)
    _, line_w = _line_geom(HW, W, K)

    out = pl.pallas_call(
        functools.partial(_stem_kernel, W=W, K=K),
        out_shape=jax.ShapeDtypeStruct((N, Cout, HW), jnp.float32),
        grid=(N,),
        in_specs=[pl.BlockSpec((None, Cin, HW), lambda n: (n, 0, 0)),
                  _full_spec(wt), _full_spec(b)],
        out_specs=pl.BlockSpec((None, Cout, HW), lambda n: (n, 0, 0)),
        scratch_shapes=[pltpu.VMEM((Cin, line_w), jnp.float32)],
        compiler_params=pltpu.CompilerParams(
            dimension_semantics=("parallel",)),
    )(xf, wt, b)

    stride = params["stem_stride"]
    if stride != 1:
        # stride-s 'same' conv == stride-1 conv subsampled; the stem runs once on
        # a tiny 1-channel input, so the extra rows are negligible.
        o = out.reshape(N, Cout, H, W)[:, :, ::stride, ::stride]
        Ho, Wo = o.shape[2], o.shape[3]
        return o.reshape(N, Cout, Ho * Wo), Ho, Wo
    return out, H, W


def block_forward(bp, x, H, W):
    """Fused Block forward. x: (N, Cin, H*W) -> ((N, Cw, Ho*Wo), Ho, Wo)."""
    N, Cin, HW = x.shape
    Cb = bp["w1"].shape[0]
    Cw = bp["w4"].shape[0]
    has_proj = bp["in_w"] != bp["out_w"]
    pool_k = int(bp["d"]) if bp["d"] else 0
    # TODO(synk): float down_rate (F.adaptive_avg_pool2d) is never produced by the
    # Encoder arch parser (down rates are ints), so only integer avg_pool is lowered.

    inputs = [x, bp["w1"], bp["b1"], bp["w2"], bp["b2"], bp["w3"], bp["b3"],
              bp["w4"], bp["b4"]]
    if has_proj:
        inputs += [bp["wp"], bp["bp"]]
    if pool_k:
        Ho, Wo = H // pool_k, W // pool_k
        inputs.append(jnp.asarray(_pool_matrix_np(H, W, pool_k)))
    else:
        Ho, Wo = H, W
    HWo = Ho * Wo

    in_specs = [pl.BlockSpec((None, Cin, HW), lambda n: (n, 0, 0))]
    in_specs += [_full_spec(a) for a in inputs[1:]]
    _, line_w = _line_geom(HW, W, 3)

    out = pl.pallas_call(
        functools.partial(_block_kernel, W=W, pool_k=pool_k, has_proj=has_proj),
        out_shape=jax.ShapeDtypeStruct((N, Cw, HWo), jnp.float32),
        grid=(N,),
        in_specs=in_specs,
        out_specs=pl.BlockSpec((None, Cw, HWo), lambda n: (n, 0, 0)),
        scratch_shapes=[pltpu.VMEM((Cb, line_w), jnp.float32)],
        compiler_params=pltpu.CompilerParams(
            dimension_semantics=("parallel",)),
    )(*inputs)
    return out, Ho, Wo


# ------------------------------- model (forward) ------------------------------ #

def encoder_forward(params, x_nchw):
    x, H, W = stem_forward(params, x_nchw)          # (N, C, H*W)
    acts = {}
    for bp in params["blocks"]:
        x, H, W = block_forward(bp, x, H, W)
        if H % 2 and H > 1:                         # F.pad(x, [0,1,0,1]) in NCHW
            Nb, Cb, _ = x.shape
            x = jnp.pad(x.reshape(Nb, Cb, H, W),
                        ((0, 0), (0, 0), (0, 1), (0, 1)))
            H, W = H + 1, W + 1
            x = x.reshape(Nb, Cb, H * W)
        acts[W] = x.reshape(x.shape[0], x.shape[1], H, W)   # key = W, value NCHW
    return acts


# ------------------------------- parameter init ------------------------------- #

def init_conv(key, cin, cout, k):
    kw, kb = jax.random.split(key)
    fan_in = cin * k * k
    bound = 1.0 / np.sqrt(fan_in)
    w = jax.random.uniform(kw, (cout, cin, k, k), jnp.float32, -bound, bound)
    b = jax.random.uniform(kb, (cout,), jnp.float32, -bound, bound)
    return w, b


def build_encoder(args, key):
    keys = iter(jax.random.split(key, 128))
    params = {}
    stages = []
    for i, stage in enumerate(args.enc_arch.split(",")):
        start = stage.index("b") + 1
        end = stage.index("d") if "d" in stage else None
        n_blocks = int(stage[start:end])
        if i == 0:
            if n_blocks == 0 and "d" not in stage:
                w, b = init_conv(next(keys), 1, args.widths[1], 7)
                params["stem_w"], params["stem_b"], params["stem_stride"] = w, b, 2
                continue
            else:
                w, b = init_conv(next(keys), 1, args.widths[0], 7)
                params["stem_w"], params["stem_b"], params["stem_stride"] = w, b, 1
        stages += [(args.widths[i], None) for _ in range(n_blocks)]
        if "d" in stage:
            stages += [(args.widths[i + 1], int(stage[stage.index("d") + 1]))]

    blocks = []
    for i, (width, d) in enumerate(stages):
        prev = stages[max(0, i - 1)][0]
        bott = int(prev / args.bottleneck)
        bp = {"in_w": prev, "out_w": width, "d": d}
        bp["w1"], bp["b1"] = init_conv(next(keys), prev, bott, 1)
        bp["w2"], bp["b2"] = init_conv(next(keys), bott, bott, 3)
        bp["w3"], bp["b3"] = init_conv(next(keys), bott, bott, 3)
        bp["w4"], bp["b4"] = init_conv(next(keys), bott, width, 1)
        if d or prev > width:
            bp["wp"], bp["bp"] = init_conv(next(keys), prev, width, 1)
        blocks.append(bp)

    scale = np.sqrt(1.0 / len(blocks))          # b.conv[-1].weight.data *= sqrt(1/L)
    for bp in blocks:
        bp["w4"] = bp["w4"] * scale
    params["blocks"] = blocks
    return params


def prepare_params(p):
    """One-time conversion of OIHW conv weights into the kernel layouts:
    (K*K, Cout, Cin) taps for spatial convs, (Cout, Cin) for 1x1 convs,
    (Cout, 1) biases -- so no transposes/reshapes run in the forward path."""
    def taps(w):                                   # (Cout,Cin,KH,KW) -> (KH*KW,Cout,Cin)
        co, ci, kh, kw = w.shape
        return jnp.transpose(w, (2, 3, 0, 1)).reshape(kh * kw, co, ci)

    out = {"stem_stride": p["stem_stride"],
           "stem_w": taps(p["stem_w"]),
           "stem_b": p["stem_b"].reshape(-1, 1)}
    blocks = []
    for bp in p["blocks"]:
        nb = {"in_w": bp["in_w"], "out_w": bp["out_w"], "d": bp["d"],
              "w1": bp["w1"][:, :, 0, 0], "b1": bp["b1"].reshape(-1, 1),
              "w2": taps(bp["w2"]), "b2": bp["b2"].reshape(-1, 1),
              "w3": taps(bp["w3"]), "b3": bp["b3"].reshape(-1, 1),
              "w4": bp["w4"][:, :, 0, 0], "b4": bp["b4"].reshape(-1, 1)}
        if "wp" in bp:
            nb["wp"] = bp["wp"][:, :, 0, 0]
            nb["bp"] = bp["bp"].reshape(-1, 1)
        blocks.append(nb)
    out["blocks"] = blocks
    return out


# ------------------------------------ main ------------------------------------ #

if __name__ == "__main__":
    args = types.SimpleNamespace(enc_arch="16b1d2,8b1", widths=[4, 8], bottleneck=2)
    key = jax.random.PRNGKey(0)
    pkey, xkey = jax.random.split(key)

    params = prepare_params(build_encoder(args, pkey))
    x = jax.random.normal(xkey, (2, 1, 16, 16), dtype=jnp.float32)  # NCHW, 1 channel

    acts = encoder_forward(params, x)
    for k in sorted(acts):
        jax.block_until_ready(acts[k])
    # sanity: expect activations at resolutions 16 and 8 for this arch
    assert 16 in acts and 8 in acts
    assert acts[16].shape == (2, 4, 16, 16) and acts[8].shape == (2, 8, 8, 8)
    print("KERNEL_OK")
</pallas_src>

<mosaic_0001>
module attributes {stable_mosaic.version = 11 : i64} {
  func.func @_stem_kernel(%arg0: i32, %arg1: memref<1x1x256xf32, #tpu.memory_space<vmem>>, %arg2: memref<49x4x1xf32, #tpu.memory_space<vmem>>, %arg3: memref<4x1xf32, #tpu.memory_space<vmem>>, %arg4: memref<1x4x256xf32, #tpu.memory_space<vmem>>, %arg5: memref<1x512xf32, #tpu.memory_space<vmem>>) attributes {dimension_semantics = [#tpu.dimension_semantics<parallel>], iteration_bounds = array<i64: 2>, scalar_prefetch = 0 : i64, scratch_operands = 1 : i64, tpu.core_type = #tpu.core_type<tc>, window_params = [{transform_indices = @transform_0, window_bounds = array<i64: 1, 1, 256>}, {pipeline_mode = #tpu.pipeline_mode<synchronous>, transform_indices = @transform_1, window_bounds = array<i64: 49, 4, 1>}, {pipeline_mode = #tpu.pipeline_mode<synchronous>, transform_indices = @transform_2, window_bounds = array<i64: 4, 1>}, {transform_indices = @transform_3, window_bounds = array<i64: 1, 4, 256>}]} {
    %cst = arith.constant 0.000000e+00 : f32
    %0 = vector.broadcast %cst : f32 to vector<1x512xf32>
    %c0 = arith.constant 0 : index
    %c0_0 = arith.constant 0 : index
    %1 = vector.load %arg5[%c0, %c0_0] : memref<1x512xf32, #tpu.memory_space<vmem>>, vector<1x512xf32>
    tpu.vector_store %arg5[%c0, %c0_0], %0 {strides = array<i32>} : memref<1x512xf32, #tpu.memory_space<vmem>>, vector<1x512xf32>,
    %c0_1 = arith.constant 0 : index
    %c0_2 = arith.constant 0 : index
    %c0_3 = arith.constant 0 : index
    %2 = vector.load %arg1[%c0_1, %c0_2, %c0_3] : memref<1x1x256xf32, #tpu.memory_space<vmem>>, vector<1x1x256xf32>
    %3 = vector.shape_cast %2 : vector<1x1x256xf32> to vector<1x256xf32>
    %4 = tpu.iota {dimensions = array<i32: 1>} : vector<1x256xi32>
    %c16_i32 = arith.constant 16 : i32
    %c0_i32 = arith.constant 0 : i32
    %5 = arith.cmpi eq, %c16_i32, %c0_i32 : i32
    %c1_i32 = arith.constant 1 : i32
    %6 = arith.select %5, %c1_i32, %c16_i32 : i32
    %7 = vector.broadcast %6 : i32 to vector<1x256xi32>
    %8 = arith.remsi %4, %7 : vector<1x256xi32>
    %c0_i32_4 = arith.constant 0 : i32
    %9 = vector.broadcast %c0_i32_4 : i32 to vector<1x256xi32>
    %10 = arith.cmpi ne, %8, %9 : vector<1x256xi32>
    %c0_i32_5 = arith.constant 0 : i32
    %11 = vector.broadcast %c0_i32_5 : i32 to vector<1x256xi32>
    %12 = arith.cmpi slt, %8, %11 : vector<1x256xi32>
    %c0_i32_6 = arith.constant 0 : i32
    %13 = arith.cmpi slt, %6, %c0_i32_6 : i32
    %14 = vector.broadcast %13 : i1 to vector<1x256xi1>
    %15 = vector.broadcast %14 : vector<1x256xi1> to vector<1x256xi1>
    %16 = arith.xori %12, %15 : vector<1x256xi1>
    %17 = arith.andi %16, %10 : vector<1x256xi1>
    %18 = vector.broadcast %6 : i32 to vector<1x256xi32>
    %19 = arith.addi %8, %18 : vector<1x256xi32>
    %20 = arith.select %17, %19, %8 : vector<1x256xi1>, vector<1x256xi32>
    %c-3_i32 = arith.constant -3 : i32
    %21 = vector.broadcast %c-3_i32 : i32 to vector<1x256xi32>
    %22 = arith.addi %20, %21 : vector<1x256xi32>
    %c0_i32_7 = arith.constant 0 : i32
    %23 = vector.broadcast %c0_i32_7 : i32 to vector<1x256xi32>
    %24 = arith.cmpi sge, %22, %23 : vector<1x256xi32>
    %c-3_i32_8 = arith.constant -3 : i32
    %25 = vector.broadcast %c-3_i32_8 : i32 to vector<1x256xi32>
    %26 = arith.addi %20, %25 : vector<1x256xi32>
    %c16_i32_9 = arith.constant 16 : i32
    %27 = vector.broadcast %c16_i32_9 : i32 to vector<1x256xi32>
    %28 = arith.cmpi slt, %26, %27 : vector<1x256xi32>
    %29 = arith.andi %24, %28 : vector<1x256xi1>
    %c-2_i32 = arith.constant -2 : i32
    %30 = vector.broadcast %c-2_i32 : i32 to vector<1x256xi32>
    %31 = arith.addi %20, %30 : vector<1x256xi32>
    %c0_i32_10 = arith.constant 0 : i32
    %32 = vector.broadcast %c0_i32_10 : i32 to vector<1x256xi32>
    %33 = arith.cmpi sge, %31, %32 : vector<1x256xi32>
    %c-2_i32_11 = arith.constant -2 : i32
    %34 = vector.broadcast %c-2_i32_11 : i32 to vector<1x256xi32>
    %35 = arith.addi %20, %34 : vector<1x256xi32>
    %c16_i32_12 = arith.constant 16 : i32
    %36 = vector.broadcast %c16_i32_12 : i32 to vector<1x256xi32>
    %37 = arith.cmpi slt, %35, %36 : vector<1x256xi32>
    %38 = arith.andi %33, %37 : vector<1x256xi1>
    %c-1_i32 = arith.constant -1 : i32
    %39 = vector.broadcast %c-1_i32 : i32 to vector<1x256xi32>
    %40 = arith.addi %20, %39 : vector<1x256xi32>
    %c0_i32_13 = arith.constant 0 : i32
    %41 = vector.broadcast %c0_i32_13 : i32 to vector<1x256xi32>
    %42 = arith.cmpi sge, %40, %41 : vector<1x256xi32>
    %c-1_i32_14 = arith.constant -1 : i32
    %43 = vector.broadcast %c-1_i32_14 : i32 to vector<1x256xi32>
    %44 = arith.addi %20, %43 : vector<1x256xi32>
    %c16_i32_15 = arith.constant 16 : i32
    %45 = vector.broadcast %c16_i32_15 : i32 to vector<1x256xi32>
    %46 = arith.cmpi slt, %44, %45 : vector<1x256xi32>
    %47 = arith.andi %42, %46 : vector<1x256xi1>
    %c1_i32_16 = arith.constant 1 : i32
    %48 = vector.broadcast %c1_i32_16 : i32 to vector<1x256xi32>
    %49 = arith.addi %20, %48 : vector<1x256xi32>
    %c0_i32_17 = arith.constant 0 : i32
    %50 = vector.broadcast %c0_i32_17 : i32 to vector<1x256xi32>
    %51 = arith.cmpi sge, %49, %50 : vector<1x256xi32>
    %c1_i32_18 = arith.constant 1 : i32
    %52 = vector.broadcast %c1_i32_18 : i32 to vector<1x256xi32>
    %53 = arith.addi %20, %52 : vector<1x256xi32>
    %c16_i32_19 = arith.constant 16 : i32
    %54 = vector.broadcast %c16_i32_19 : i32 to vector<1x256xi32>
    %55 = arith.cmpi slt, %53, %54 : vector<1x256xi32>
    %56 = arith.andi %51, %55 : vector<1x256xi1>
    %c2_i32 = arith.constant 2 : i32
    %57 = vector.broadcast %c2_i32 : i32 to vector<1x256xi32>
    %58 = arith.addi %20, %57 : vector<1x256xi32>
    %c0_i32_20 = arith.constant 0 : i32
    %59 = vector.broadcast %c0_i32_20 : i32 to vector<1x256xi32>
    %60 = arith.cmpi sge, %58, %59 : vector<1x256xi32>
    %c2_i32_21 = arith.constant 2 : i32
    %61 = vector.broadcast %c2_i32_21 : i32 to vector<1x256xi32>
    %62 = arith.addi %20, %61 : vector<1x256xi32>
    %c16_i32_22 = arith.constant 16 : i32
    %63 = vector.broadcast %c16_i32_22 : i32 to vector<1x256xi32>
    %64 = arith.cmpi slt, %62, %63 : vector<1x256xi32>
    %65 = arith.andi %60, %64 : vector<1x256xi1>
    %c3_i32 = arith.constant 3 : i32
    %66 = vector.broadcast %c3_i32 : i32 to vector<1x256xi32>
    %67 = arith.addi %20, %66 : vector<1x256xi32>
    %c0_i32_23 = arith.constant 0 : i32
    %68 = vector.broadcast %c0_i32_23 : i32 to vector<1x256xi32>
    %69 = arith.cmpi sge, %67, %68 : vector<1x256xi32>
    %c3_i32_24 = arith.constant 3 : i32
    %70 = vector.broadcast %c3_i32_24 : i32 to vector<1x256xi32>
    %71 = arith.addi %20, %70 : vector<1x256xi32>
    %c16_i32_25 = arith.constant 16 : i32
    %72 = vector.broadcast %c16_i32_25 : i32 to vector<1x256xi32>
    %73 = arith.cmpi slt, %71, %72 : vector<1x256xi32>
    %74 = arith.andi %69, %73 : vector<1x256xi1>
    %c0_26 = arith.constant 0 : index
    %c128 = arith.constant 128 : index
    %75 = vector.load %arg5[%c0_26, %c128] : memref<1x512xf32, #tpu.memory_space<vmem>>, vector<1x256xf32>
    tpu.vector_store %arg5[%c0_26, %c128], %3 {strides = array<i32>} : memref<1x512xf32, #tpu.memory_space<vmem>>, vector<1x256xf32>,
    %c0_27 = arith.constant 0 : index
    %c77 = arith.constant 77 : index
    %76 = vector.load %arg5[%c0_27, %c77] : memref<1x512xf32, #tpu.memory_space<vmem>>, vector<1x256xf32>
    %cst_28 = arith.constant 0.000000e+00 : f32
    %77 = vector.broadcast %cst_28 : f32 to vector<1x256xf32>
    %78 = arith.select %29, %76, %77 : vector<1x256xi1>, vector<1x256xf32>
    %c0_29 = arith.constant 0 : index
    %c0_30 = arith.constant 0 : index
    %c0_31 = arith.constant 0 : index
    %79 = vector.load %arg2[%c0_29, %c0_30, %c0_31] : memref<49x4x1xf32, #tpu.memory_space<vmem>>, vector<1x4x1xf32>
    %80 = vector.shape_cast %79 : vector<1x4x1xf32> to vector<4x1xf32>
    %81 = vector.broadcast %80 : vector<4x1xf32> to vector<4x256xf32>
    %82 = vector.broadcast %78 : vector<1x256xf32> to vector<4x256xf32>
    %83 = arith.mulf %81, %82 : vector<4x256xf32>
    %c0_32 = arith.constant 0 : index
    %c78 = arith.constant 78 : index
    %84 = vector.load %arg5[%c0_32, %c78] : memref<1x512xf32, #tpu.memory_space<vmem>>, vector<1x256xf32>
    %cst_33 = arith.constant 0.000000e+00 : f32
    %85 = vector.broadcast %cst_33 : f32 to vector<1x256xf32>
    %86 = arith.select %38, %84, %85 : vector<1x256xi1>, vector<1x256xf32>
    %c1 = arith.constant 1 : index
    %c0_34 = arith.constant 0 : index
    %c0_35 = arith.constant 0 : index
    %87 = vector.load %arg2[%c1, %c0_34, %c0_35] : memref<49x4x1xf32, #tpu.memory_space<vmem>>, vector<1x4x1xf32>
    %88 = vector.shape_cast %87 : vector<1x4x1xf32> to vector<4x1xf32>
    %89 = vector.broadcast %88 : vector<4x1xf32> to vector<4x256xf32>
    %90 = vector.broadcast %86 : vector<1x256xf32> to vector<4x256xf32>
    %91 = arith.mulf %89, %90 : vector<4x256xf32>
    %92 = arith.addf %83, %91 : vector<4x256xf32>
    %c0_36 = arith.constant 0 : index
    %c79 = arith.constant 79 : index
    %93 = vector.load %arg5[%c0_36, %c79] : memref<1x512xf32, #tpu.memory_space<vmem>>, vector<1x256xf32>
    %cst_37 = arith.constant 0.000000e+00 : f32
    %94 = vector.broadcast %cst_37 : f32 to vector<1x256xf32>
    %95 = arith.select %47, %93, %94 : vector<1x256xi1>, vector<1x256xf32>
    %c2 = arith.constant 2 : index
    %c0_38 = arith.constant 0 : index
    %c0_39 = arith.constant 0 : index
    %96 = vector.load %arg2[%c2, %c0_38, %c0_39] : memref<49x4x1xf32, #tpu.memory_space<vmem>>, vector<1x4x1xf32>
    %97 = vector.shape_cast %96 : vector<1x4x1xf32> to vector<4x1xf32>
    %98 = vector.broadcast %97 : vector<4x1xf32> to vector<4x256xf32>
    %99 = vector.broadcast %95 : vector<1x256xf32> to vector<4x256xf32>
    %100 = arith.mulf %98, %99 : vector<4x256xf32>
    %101 = arith.addf %92, %100 : vector<4x256xf32>
    %c0_40 = arith.constant 0 : index
    %c80 = arith.constant 80 : index
    %102 = vector.load %arg5[%c0_40, %c80] : memref<1x512xf32, #tpu.memory_space<vmem>>, vector<1x256xf32>
    %c3 = arith.constant 3 : index
    %c0_41 = arith.constant 0 : index
    %c0_42 = arith.constant 0 : index
    %103 = vector.load %arg2[%c3, %c0_41, %c0_42] : memref<49x4x1xf32, #tpu.memory_space<vmem>>, vector<1x4x1xf32>
    %104 = vector.shape_cast %103 : vector<1x4x1xf32> to vector<4x1xf32>
    %105 = vector.broadcast %104 : vector<4x1xf32> to vector<4x256xf32>
    %106 = vector.broadcast %102 : vector<1x256xf32> to vector<4x256xf32>
    %107 = arith.mulf %105, %106 : vector<4x256xf32>
    %108 = arith.addf %101, %107 : vector<4x256xf32>
    %c0_43 = arith.constant 0 : index
    %c81 = arith.constant 81 : index
    %109 = vector.load %arg5[%c0_43, %c81] : memref<1x512xf32, #tpu.memory_space<vmem>>, vector<1x256xf32>
    %cst_44 = arith.constant 0.000000e+00 : f32
    %110 = vector.broadcast %cst_44 : f32 to vector<1x256xf32>
    %111 = arith.select %56, %109, %110 : vector<1x256xi1>, vector<1x256xf32>
    %c4 = arith.constant 4 : index
    %c0_45 = arith.constant 0 : index
    %c0_46 = arith.constant 0 : index
    %112 = vector.load %arg2[%c4, %c0_45, %c0_46] : memref<49x4x1xf32, #tpu.memory_space<vmem>>, vector<1x4x1xf32>
    %113 = vector.shape_cast %112 : vector<1x4x1xf32> to vector<4x1xf32>
    %114 = vector.broadcast %113 : vector<4x1xf32> to vector<4x256xf32>
    %115 = vector.broadcast %111 : vector<1x256xf32> to vector<4x256xf32>
    %116 = arith.mulf %114, %115 : vector<4x256xf32>
    %117 = arith.addf %108, %116 : vector<4x256xf32>
    %c0_47 = arith.constant 0 : index
    %c82 = arith.constant 82 : index
    %118 = vector.load %arg5[%c0_47, %c82] : memref<1x512xf32, #tpu.memory_space<vmem>>, vector<1x256xf32>
    %cst_48 = arith.constant 0.000000e+00 : f32
    %119 = vector.broadcast %cst_48 : f32 to vector<1x256xf32>
    %120 = arith.select %65, %118, %119 : vector<1x256xi1>, vector<1x256xf32>
    %c5 = arith.constant 5 : index
    %c0_49 = arith.constant 0 : index
    %c0_50 = arith.constant 0 : index
    %121 = vector.load %arg2[%c5, %c0_49, %c0_50] : memref<49x4x1xf32, #tpu.memory_space<vmem>>, vector<1x4x1xf32>
    %122 = vector.shape_cast %121 : vector<1x4x1xf32> to vector<4x1xf32>
    %123 = vector.broadcast %122 : vector<4x1xf32> to vector<4x256xf32>
    %124 = vector.broadcast %120 : vector<1x256xf32> to vector<4x256xf32>
    %125 = arith.mulf %123, %124 : vector<4x256xf32>
    %126 = arith.addf %117, %125 : vector<4x256xf32>
    %c0_51 = arith.constant 0 : index
    %c83 = arith.constant 83 : index
    %127 = vector.load %arg5[%c0_51, %c83] : memref<1x512xf32, #tpu.memory_space<vmem>>, vector<1x256xf32>
    %cst_52 = arith.constant 0.000000e+00 : f32
    %128 = vector.broadcast %cst_52 : f32 to vector<1x256xf32>
    %129 = arith.select %74, %127, %128 : vector<1x256xi1>, vector<1x256xf32>
    %c6 = arith.constant 6 : index
    %c0_53 = arith.constant 0 : index
    %c0_54 = arith.constant 0 : index
    %130 = vector.load %arg2[%c6, %c0_53, %c0_54] : memref<49x4x1xf32, #tpu.memory_space<vmem>>, vector<1x4x1xf32>
    %131 = vector.shape_cast %130 : vector<1x4x1xf32> to vector<4x1xf32>
    %132 = vector.broadcast %131 : vector<4x1xf32> to vector<4x256xf32>
    %133 = vector.broadcast %129 : vector<1x256xf32> to vector<4x256xf32>
    %134 = arith.mulf %132, %133 : vector<4x256xf32>
    %135 = arith.addf %126, %134 : vector<4x256xf32>
    %c0_55 = arith.constant 0 : index
    %c93 = arith.constant 93 : index
    %136 = vector.load %arg5[%c0_55, %c93] : memref<1x512xf32, #tpu.memory_space<vmem>>, vector<1x256xf32>
    %cst_56 = arith.constant 0.000000e+00 : f32
    %137 = vector.broadcast %cst_56 : f32 to vector<1x256xf32>
    %138 = arith.select %29, %136, %137 : vector<1x256xi1>, vector<1x256xf32>
    %c7 = arith.constant 7 : index
    %c0_57 = arith.constant 0 : index
    %c0_58 = arith.constant 0 : index
    %139 = vector.load %arg2[%c7, %c0_57, %c0_58] : memref<49x4x1xf32, #tpu.memory_space<vmem>>, vector<1x4x1xf32>
    %140 = vector.shape_cast %139 : vector<1x4x1xf32> to vector<4x1xf32>
    %141 = vector.broadcast %140 : vector<4x1xf32> to vector<4x256xf32>
    %142 = vector.broadcast %138 : vector<1x256xf32> to vector<4x256xf32>
    %143 = arith.mulf %141, %142 : vector<4x256xf32>
    %144 = arith.addf %135, %143 : vector<4x256xf32>
    %c0_59 = arith.constant 0 : index
    %c94 = arith.constant 94 : index
    %145 = vector.load %arg5[%c0_59, %c94] : memref<1x512xf32, #tpu.memory_space<vmem>>, vector<1x256xf32>
    %cst_60 = arith.constant 0.000000e+00 : f32
    %146 = vector.broadcast %cst_60 : f32 to vector<1x256xf32>
    %147 = arith.select %38, %145, %146 : vector<1x256xi1>, vector<1x256xf32>
    %c8 = arith.constant 8 : index
    %c0_61 = arith.constant 0 : index
    %c0_62 = arith.constant 0 : index
    %148 = vector.load %arg2[%c8, %c0_61, %c0_62] : memref<49x4x1xf32, #tpu.memory_space<vmem>>, vector<1x4x1xf32>
    %149 = vector.shape_cast %148 : vector<1x4x1xf32> to vector<4x1xf32>
    %150 = vector.broadcast %149 : vector<4x1xf32> to vector<4x256xf32>
    %151 = vector.broadcast %147 : vector<1x256xf32> to vector<4x256xf32>
    %152 = arith.mulf %150, %151 : vector<4x256xf32>
    %153 = arith.addf %144, %152 : vector<4x256xf32>
    %c0_63 = arith.constant 0 : index
    %c95 = arith.constant 95 : index
    %154 = vector.load %arg5[%c0_63, %c95] : memref<1x512xf32, #tpu.memory_space<vmem>>, vector<1x256xf32>
    %cst_64 = arith.constant 0.000000e+00 : f32
    %155 = vector.broadcast %cst_64 : f32 to vector<1x256xf32>
    %156 = arith.select %47, %154, %155 : vector<1x256xi1>, vector<1x256xf32>
    %c9 = arith.constant 9 : index
    %c0_65 = arith.constant 0 : index
    %c0_66 = arith.constant 0 : index
    %157 = vector.load %arg2[%c9, %c0_65, %c0_66] : memref<49x4x1xf32, #tpu.memory_space<vmem>>, vector<1x4x1xf32>
    %158 = vector.shape_cast %157 : vector<1x4x1xf32> to vector<4x1xf32>
    %159 = vector.broadcast %158 : vector<4x1xf32> to vector<4x256xf32>
    %160 = vector.broadcast %156 : vector<1x256xf32> to vector<4x256xf32>
    %161 = arith.mulf %159, %160 : vector<4x256xf32>
    %162 = arith.addf %153, %161 : vector<4x256xf32>
    %c0_67 = arith.constant 0 : index
    %c96 = arith.constant 96 : index
    %163 = vector.load %arg5[%c0_67, %c96] : memref<1x512xf32, #tpu.memory_space<vmem>>, vector<1x256xf32>
    %c10 = arith.constant 10 : index
    %c0_68 = arith.constant 0 : index
    %c0_69 = arith.constant 0 : index
    %164 = vector.load %arg2[%c10, %c0_68, %c0_69] : memref<49x4x1xf32, #tpu.memory_space<vmem>>, vector<1x4x1xf32>
    %165 = vector.shape_cast %164 : vector<1x4x1xf32> to vector<4x1xf32>
    %166 = vector.broadcast %165 : vector<4x1xf32> to vector<4x256xf32>
    %167 = vector.broadcast %163 : vector<1x256xf32> to vector<4x256xf32>
    %168 = arith.mulf %166, %167 : vector<4x256xf32>
    %169 = arith.addf %162, %168 : vector<4x256xf32>
    %c0_70 = arith.constant 0 : index
    %c97 = arith.constant 97 : index
    %170 = vector.load %arg5[%c0_70, %c97] : memref<1x512xf32, #tpu.memory_space<vmem>>, vector<1x256xf32>
    %cst_71 = arith.constant 0.000000e+00 : f32
    %171 = vector.broadcast %cst_71 : f32 to vector<1x256xf32>
    %172 = arith.select %56, %170, %171 : vector<1x256xi1>, vector<1x256xf32>
    %c11 = arith.constant 11 : index
    %c0_72 = arith.constant 0 : index
    %c0_73 = arith.constant 0 : index
    %173 = vector.load %arg2[%c11, %c0_72, %c0_73] : memref<49x4x1xf32, #tpu.memory_space<vmem>>, vector<1x4x1xf32>
    %174 = vector.shape_cast %173 : vector<1x4x1xf32> to vector<4x1xf32>
    %175 = vector.broadcast %174 : vector<4x1xf32> to vector<4x256xf32>
    %176 = vector.broadcast %172 : vector<1x256xf32> to vector<4x256xf32>
    %177 = arith.mulf %175, %176 : vector<4x256xf32>
    %178 = arith.addf %169, %177 : vector<4x256xf32>
    %c0_74 = arith.constant 0 : index
    %c98 = arith.constant 98 : index
    %179 = vector.load %arg5[%c0_74, %c98] : memref<1x512xf32, #tpu.memory_space<vmem>>, vector<1x256xf32>
    %cst_75 = arith.constant 0.000000e+00 : f32
    %180 = vector.broadcast %cst_75 : f32 to vector<1x256xf32>
    %181 = arith.select %65, %179, %180 : vector<1x256xi1>, vector<1x256xf32>
    %c12 = arith.constant 12 : index
    %c0_76 = arith.constant 0 : index
    %c0_77 = arith.constant 0 : index
    %182 = vector.load %arg2[%c12, %c0_76, %c0_77] : memref<49x4x1xf32, #tpu.memory_space<vmem>>, vector<1x4x1xf32>
    %183 = vector.shape_cast %182 : vector<1x4x1xf32> to vector<4x1xf32>
    %184 = vector.broadcast %183 : vector<4x1xf32> to vector<4x256xf32>
    %185 = vector.broadcast %181 : vector<1x256xf32> to vector<4x256xf32>
    %186 = arith.mulf %184, %185 : vector<4x256xf32>
    %187 = arith.addf %178, %186 : vector<4x256xf32>
    %c0_78 = arith.constant 0 : index
    %c99 = arith.constant 99 : index
    %188 = vector.load %arg5[%c0_78, %c99] : memref<1x512xf32, #tpu.memory_space<vmem>>, vector<1x256xf32>
    %cst_79 = arith.constant 0.000000e+00 : f32
    %189 = vector.broadcast %cst_79 : f32 to vector<1x256xf32>
    %190 = arith.select %74, %188, %189 : vector<1x256xi1>, vector<1x256xf32>
    %c13 = arith.constant 13 : index
    %c0_80 = arith.constant 0 : index
    %c0_81 = arith.constant 0 : index
    %191 = vector.load %arg2[%c13, %c0_80, %c0_81] : memref<49x4x1xf32, #tpu.memory_space<vmem>>, vector<1x4x1xf32>
    %192 = vector.shape_cast %191 : vector<1x4x1xf32> to vector<4x1xf32>
    %193 = vector.broadcast %192 : vector<4x1xf32> to vector<4x256xf32>
    %194 = vector.broadcast %190 : vector<1x256xf32> to vector<4x256xf32>
    %195 = arith.mulf %193, %194 : vector<4x256xf32>
    %196 = arith.addf %187, %195 : vector<4x256xf32>
    %c0_82 = arith.constant 0 : index
    %c109 = arith.constant 109 : index
    %197 = vector.load %arg5[%c0_82, %c109] : memref<1x512xf32, #tpu.memory_space<vmem>>, vector<1x256xf32>
    %cst_83 = arith.constant 0.000000e+00 : f32
    %198 = vector.broadcast %cst_83 : f32 to vector<1x256xf32>
    %199 = arith.select %29, %197, %198 : vector<1x256xi1>, vector<1x256xf32>
    %c14 = arith.constant 14 : index
    %c0_84 = arith.constant 0 : index
    %c0_85 = arith.constant 0 : index
    %200 = vector.load %arg2[%c14, %c0_84, %c0_85] : memref<49x4x1xf32, #tpu.memory_space<vmem>>, vector<1x4x1xf32>
    %201 = vector.shape_cast %200 : vector<1x4x1xf32> to vector<4x1xf32>
    %202 = vector.broadcast %201 : vector<4x1xf32> to vector<4x256xf32>
    %203 = vector.broadcast %199 : vector<1x256xf32> to vector<4x256xf32>
    %204 = arith.mulf %202, %203 : vector<4x256xf32>
    %205 = arith.addf %196, %204 : vector<4x256xf32>
    %c0_86 = arith.constant 0 : index
    %c110 = arith.constant 110 : index
    %206 = vector.load %arg5[%c0_86, %c110] : memref<1x512xf32, #tpu.memory_space<vmem>>, vector<1x256xf32>
    %cst_87 = arith.constant 0.000000e+00 : f32
    %207 = vector.broadcast %cst_87 : f32 to vector<1x256xf32>
    %208 = arith.select %38, %206, %207 : vector<1x256xi1>, vector<1x256xf32>
    %c15 = arith.constant 15 : index
    %c0_88 = arith.constant 0 : index
    %c0_89 = arith.constant 0 : index
    %209 = vector.load %arg2[%c15, %c0_88, %c0_89] : memref<49x4x1xf32, #tpu.memory_space<vmem>>, vector<1x4x1xf32>
    %210 = vector.shape_cast %209 : vector<1x4x1xf32> to vector<4x1xf32>
    %211 = vector.broadcast %210 : vector<4x1xf32> to vector<4x256xf32>
    %212 = vector.broadcast %208 : vector<1x256xf32> to vector<4x256xf32>
    %213 = arith.mulf %211, %212 : vector<4x256xf32>
    %214 = arith.addf %205, %213 : vector<4x256xf32>
    %c0_90 = arith.constant 0 : index
    %c111 = arith.constant 111 : index
    %215 = vector.load %arg5[%c0_90, %c111] : memref<1x512xf32, #tpu.memory_space<vmem>>, vector<1x256xf32>
    %cst_91 = arith.constant 0.000000e+00 : f32
    %216 = vector.broadcast %cst_91 : f32 to vector<1x256xf32>
    %217 = arith.select %47, %215, %216 : vector<1x256xi1>, vector<1x256xf32>
    %c16 = arith.constant 16 : index
    %c0_92 = arith.constant 0 : index
    %c0_93 = arith.constant 0 : index
    %218 = vector.load %arg2[%c16, %c0_92, %c0_93] : memref<49x4x1xf32, #tpu.memory_space<vmem>>, vector<1x4x1xf32>
    %219 = vector.shape_cast %218 : vector<1x4x1xf32> to vector<4x1xf32>
    %220 = vector.broadcast %219 : vector<4x1xf32> to vector<4x256xf32>
    %221 = vector.broadcast %217 : vector<1x256xf32> to vector<4x256xf32>
    %222 = arith.mulf %220, %221 : vector<4x256xf32>
    %223 = arith.addf %214, %222 : vector<4x256xf32>
    %c0_94 = arith.constant 0 : index
    %c112 = arith.constant 112 : index
    %224 = vector.load %arg5[%c0_94, %c112] : memref<1x512xf32, #tpu.memory_space<vmem>>, vector<1x256xf32>
    %c17 = arith.constant 17 : index
    %c0_95 = arith.constant 0 : index
    %c0_96 = arith.constant 0 : index
    %225 = vector.load %arg2[%c17, %c0_95, %c0_96] : memref<49x4x1xf32, #tpu.memory_space<vmem>>, vector<1x4x1xf32>
    %226 = vector.shape_cast %225 : vector<1x4x1xf32> to vector<4x1xf32>
    %227 = vector.broadcast %226 : vector<4x1xf32> to vector<4x256xf32>
    %228 = vector.broadcast %224 : vector<1x256xf32> to vector<4x256xf32>
    %229 = arith.mulf %227, %228 : vector<4x256xf32>
    %230 = arith.addf %223, %229 : vector<4x256xf32>
    %c0_97 = arith.constant 0 : index
    %c113 = arith.constant 113 : index
    %231 = vector.load %arg5[%c0_97, %c113] : memref<1x512xf32, #tpu.memory_space<vmem>>, vector<1x256xf32>
    %cst_98 = arith.constant 0.000000e+00 : f32
    %232 = vector.broadcast %cst_98 : f32 to vector<1x256xf32>
    %233 = arith.select %56, %231, %232 : vector<1x256xi1>, vector<1x256xf32>
    %c18 = arith.constant 18 : index
    %c0_99 = arith.constant 0 : index
    %c0_100 = arith.constant 0 : index
    %234 = vector.load %arg2[%c18, %c0_99, %c0_100] : memref<49x4x1xf32, #tpu.memory_space<vmem>>, vector<1x4x1xf32>
    %235 = vector.shape_cast %234 : vector<1x4x1xf32> to vector<4x1xf32>
    %236 = vector.broadcast %235 : vector<4x1xf32> to vector<4x256xf32>
    %237 = vector.broadcast %233 : vector<1x256xf32> to vector<4x256xf32>
    %238 = arith.mulf %236, %237 : vector<4x256xf32>
    %239 = arith.addf %230, %238 : vector<4x256xf32>
    %c0_101 = arith.constant 0 : index
    %c114 = arith.constant 114 : index
    %240 = vector.load %arg5[%c0_101, %c114] : memref<1x512xf32, #tpu.memory_space<vmem>>, vector<1x256xf32>
    %cst_102 = arith.constant 0.000000e+00 : f32
    %241 = vector.broadcast %cst_102 : f32 to vector<1x256xf32>
    %242 = arith.select %65, %240, %241 : vector<1x256xi1>, vector<1x256xf32>
    %c19 = arith.constant 19 : index
    %c0_103 = arith.constant 0 : index
    %c0_104 = arith.constant 0 : index
    %243 = vector.load %arg2[%c19, %c0_103, %c0_104] : memref<49x4x1xf32, #tpu.memory_space<vmem>>, vector<1x4x1xf32>
    %244 = vector.shape_cast %243 : vector<1x4x1xf32> to vector<4x1xf32>
    %245 = vector.broadcast %244 : vector<4x1xf32> to vector<4x256xf32>
    %246 = vector.broadcast %242 : vector<1x256xf32> to vector<4x256xf32>
    %247 = arith.mulf %245, %246 : vector<4x256xf32>
    %248 = arith.addf %239, %247 : vector<4x256xf32>
    %c0_105 = arith.constant 0 : index
    %c115 = arith.constant 115 : index
    %249 = vector.load %arg5[%c0_105, %c115] : memref<1x512xf32, #tpu.memory_space<vmem>>, vector<1x256xf32>
    %cst_106 = arith.constant 0.000000e+00 : f32
    %250 = vector.broadcast %cst_106 : f32 to vector<1x256xf32>
    %251 = arith.select %74, %249, %250 : vector<1x256xi1>, vector<1x256xf32>
    %c20 = arith.constant 20 : index
    %c0_107 = arith.constant 0 : index
    %c0_108 = arith.constant 0 : index
    %252 = vector.load %arg2[%c20, %c0_107, %c0_108] : memref<49x4x1xf32, #tpu.memory_space<vmem>>, vector<1x4x1xf32>
    %253 = vector.shape_cast %252 : vector<1x4x1xf32> to vector<4x1xf32>
    %254 = vector.broadcast %253 : vector<4x1xf32> to vector<4x256xf32>
    %255 = vector.broadcast %251 : vector<1x256xf32> to vector<4x256xf32>
    %256 = arith.mulf %254, %255 : vector<4x256xf32>
    %257 = arith.addf %248, %256 : vector<4x256xf32>
    %c0_109 = arith.constant 0 : index
    %c125 = arith.constant 125 : index
    %258 = vector.load %arg5[%c0_109, %c125] : memref<1x512xf32, #tpu.memory_space<vmem>>, vector<1x256xf32>
    %cst_110 = arith.constant 0.000000e+00 : f32
    %259 = vector.broadcast %cst_110 : f32 to vector<1x256xf32>
    %260 = arith.select %29, %258, %259 : vector<1x256xi1>, vector<1x256xf32>
    %c21 = arith.constant 21 : index
    %c0_111 = arith.constant 0 : index
    %c0_112 = arith.constant 0 : index
    %261 = vector.load %arg2[%c21, %c0_111, %c0_112] : memref<49x4x1xf32, #tpu.memory_space<vmem>>, vector<1x4x1xf32>
    %262 = vector.shape_cast %261 : vector<1x4x1xf32> to vector<4x1xf32>
    %263 = vector.broadcast %262 : vector<4x1xf32> to vector<4x256xf32>
    %264 = vector.broadcast %260 : vector<1x256xf32> to vector<4x256xf32>
    %265 = arith.mulf %263, %264 : vector<4x256xf32>
    %266 = arith.addf %257, %265 : vector<4x256xf32>
    %c0_113 = arith.constant 0 : index
    %c126 = arith.constant 126 : index
    %267 = vector.load %arg5[%c0_113, %c126] : memref<1x512xf32, #tpu.memory_space<vmem>>, vector<1x256xf32>
    %cst_114 = arith.constant 0.000000e+00 : f32
    %268 = vector.broadcast %cst_114 : f32 to vector<1x256xf32>
    %269 = arith.select %38, %267, %268 : vector<1x256xi1>, vector<1x256xf32>
    %c22 = arith.constant 22 : index
    %c0_115 = arith.constant 0 : index
    %c0_116 = arith.constant 0 : index
    %270 = vector.load %arg2[%c22, %c0_115, %c0_116] : memref<49x4x1xf32, #tpu.memory_space<vmem>>, vector<1x4x1xf32>
    %271 = vector.shape_cast %270 : vector<1x4x1xf32> to vector<4x1xf32>
    %272 = vector.broadcast %271 : vector<4x1xf32> to vector<4x256xf32>
    %273 = vector.broadcast %269 : vector<1x256xf32> to vector<4x256xf32>
    %274 = arith.mulf %272, %273 : vector<4x256xf32>
    %275 = arith.addf %266, %274 : vector<4x256xf32>
    %c0_117 = arith.constant 0 : index
    %c127 = arith.constant 127 : index
    %276 = vector.load %arg5[%c0_117, %c127] : memref<1x512xf32, #tpu.memory_space<vmem>>, vector<1x256xf32>
    %cst_118 = arith.constant 0.000000e+00 : f32
    %277 = vector.broadcast %cst_118 : f32 to vector<1x256xf32>
    %278 = arith.select %47, %276, %277 : vector<1x256xi1>, vector<1x256xf32>
    %c23 = arith.constant 23 : index
    %c0_119 = arith.constant 0 : index
    %c0_120 = arith.constant 0 : index
    %279 = vector.load %arg2[%c23, %c0_119, %c0_120] : memref<49x4x1xf32, #tpu.memory_space<vmem>>, vector<1x4x1xf32>
    %280 = vector.shape_cast %279 : vector<1x4x1xf32> to vector<4x1xf32>
    %281 = vector.broadcast %280 : vector<4x1xf32> to vector<4x256xf32>
    %282 = vector.broadcast %278 : vector<1x256xf32> to vector<4x256xf32>
    %283 = arith.mulf %281, %282 : vector<4x256xf32>
    %284 = arith.addf %275, %283 : vector<4x256xf32>
    %c0_121 = arith.constant 0 : index
    %c128_122 = arith.constant 128 : index
    %285 = vector.load %arg5[%c0_121, %c128_122] : memref<1x512xf32, #tpu.memory_space<vmem>>, vector<1x256xf32>
    %c24 = arith.constant 24 : index
    %c0_123 = arith.constant 0 : index
    %c0_124 = arith.constant 0 : index
    %286 = vector.load %arg2[%c24, %c0_123, %c0_124] : memref<49x4x1xf32, #tpu.memory_space<vmem>>, vector<1x4x1xf32>
    %287 = vector.shape_cast %286 : vector<1x4x1xf32> to vector<4x1xf32>
    %288 = vector.broadcast %287 : vector<4x1xf32> to vector<4x256xf32>
    %289 = vector.broadcast %285 : vector<1x256xf32> to vector<4x256xf32>
    %290 = arith.mulf %288, %289 : vector<4x256xf32>
    %291 = arith.addf %284, %290 : vector<4x256xf32>
    %c0_125 = arith.constant 0 : index
    %c129 = arith.constant 129 : index
    %292 = vector.load %arg5[%c0_125, %c129] : memref<1x512xf32, #tpu.memory_space<vmem>>, vector<1x256xf32>
    %cst_126 = arith.constant 0.000000e+00 : f32
    %293 = vector.broadcast %cst_126 : f32 to vector<1x256xf32>
    %294 = arith.select %56, %292, %293 : vector<1x256xi1>, vector<1x256xf32>
    %c25 = arith.constant 25 : index
    %c0_127 = arith.constant 0 : index
    %c0_128 = arith.constant 0 : index
    %295 = vector.load %arg2[%c25, %c0_127, %c0_128] : memref<49x4x1xf32, #tpu.memory_space<vmem>>, vector<1x4x1xf32>
    %296 = vector.shape_cast %295 : vector<1x4x1xf32> to vector<4x1xf32>
    %297 = vector.broadcast %296 : vector<4x1xf32> to vector<4x256xf32>
    %298 = vector.broadcast %294 : vector<1x256xf32> to vector<4x256xf32>
    %299 = arith.mulf %297, %298 : vector<4x256xf32>
    %300 = arith.addf %291, %299 : vector<4x256xf32>
    %c0_129 = arith.constant 0 : index
    %c130 = arith.constant 130 : index
    %301 = vector.load %arg5[%c0_129, %c130] : memref<1x512xf32, #tpu.memory_space<vmem>>, vector<1x256xf32>
    %cst_130 = arith.constant 0.000000e+00 : f32
    %302 = vector.broadcast %cst_130 : f32 to vector<1x256xf32>
    %303 = arith.select %65, %301, %302 : vector<1x256xi1>, vector<1x256xf32>
    %c26 = arith.constant 26 : index
    %c0_131 = arith.constant 0 : index
    %c0_132 = arith.constant 0 : index
    %304 = vector.load %arg2[%c26, %c0_131, %c0_132] : memref<49x4x1xf32, #tpu.memory_space<vmem>>, vector<1x4x1xf32>
    %305 = vector.shape_cast %304 : vector<1x4x1xf32> to vector<4x1xf32>
    %306 = vector.broadcast %305 : vector<4x1xf32> to vector<4x256xf32>
    %307 = vector.broadcast %303 : vector<1x256xf32> to vector<4x256xf32>
    %308 = arith.mulf %306, %307 : vector<4x256xf32>
    %309 = arith.addf %300, %308 : vector<4x256xf32>
    %c0_133 = arith.constant 0 : index
    %c131 = arith.constant 131 : index
    %310 = vector.load %arg5[%c0_133, %c131] : memref<1x512xf32, #tpu.memory_space<vmem>>, vector<1x256xf32>
    %cst_134 = arith.constant 0.000000e+00 : f32
    %311 = vector.broadcast %cst_134 : f32 to vector<1x256xf32>
    %312 = arith.select %74, %310, %311 : vector<1x256xi1>, vector<1x256xf32>
    %c27 = arith.constant 27 : index
    %c0_135 = arith.constant 0 : index
    %c0_136 = arith.constant 0 : index
    %313 = vector.load %arg2[%c27, %c0_135, %c0_136] : memref<49x4x1xf32, #tpu.memory_space<vmem>>, vector<1x4x1xf32>
    %314 = vector.shape_cast %313 : vector<1x4x1xf32> to vector<4x1xf32>
    %315 = vector.broadcast %314 : vector<4x1xf32> to vector<4x256xf32>
    %316 = vector.broadcast %312 : vector<1x256xf32> to vector<4x256xf32>
    %317 = arith.mulf %315, %316 : vector<4x256xf32>
    %318 = arith.addf %309, %317 : vector<4x256xf32>
    %c0_137 = arith.constant 0 : index
    %c141 = arith.constant 141 : index
    %319 = vector.load %arg5[%c0_137, %c141] : memref<1x512xf32, #tpu.memory_space<vmem>>, vector<1x256xf32>
    %cst_138 = arith.constant 0.000000e+00 : f32
    %320 = vector.broadcast %cst_138 : f32 to vector<1x256xf32>
    %321 = arith.select %29, %319, %320 : vector<1x256xi1>, vector<1x256xf32>
    %c28 = arith.constant 28 : index
    %c0_139 = arith.constant 0 : index
    %c0_140 = arith.constant 0 : index
    %322 = vector.load %arg2[%c28, %c0_139, %c0_140] : memref<49x4x1xf32, #tpu.memory_space<vmem>>, vector<1x4x1xf32>
    %323 = vector.shape_cast %322 : vector<1x4x1xf32> to vector<4x1xf32>
    %324 = vector.broadcast %323 : vector<4x1xf32> to vector<4x256xf32>
    %325 = vector.broadcast %321 : vector<1x256xf32> to vector<4x256xf32>
    %326 = arith.mulf %324, %325 : vector<4x256xf32>
    %327 = arith.addf %318, %326 : vector<4x256xf32>
    %c0_141 = arith.constant 0 : index
    %c142 = arith.constant 142 : index
    %328 = vector.load %arg5[%c0_141, %c142] : memref<1x512xf32, #tpu.memory_space<vmem>>, vector<1x256xf32>
    %cst_142 = arith.constant 0.000000e+00 : f32
    %329 = vector.broadcast %cst_142 : f32 to vector<1x256xf32>
    %330 = arith.select %38, %328, %329 : vector<1x256xi1>, vector<1x256xf32>
    %c29 = arith.constant 29 : index
    %c0_143 = arith.constant 0 : index
    %c0_144 = arith.constant 0 : index
    %331 = vector.load %arg2[%c29, %c0_143, %c0_144] : memref<49x4x1xf32, #tpu.memory_space<vmem>>, vector<1x4x1xf32>
    %332 = vector.shape_cast %331 : vector<1x4x1xf32> to vector<4x1xf32>
    %333 = vector.broadcast %332 : vector<4x1xf32> to vector<4x256xf32>
    %334 = vector.broadcast %330 : vector<1x256xf32> to vector<4x256xf32>
    %335 = arith.mulf %333, %334 : vector<4x256xf32>
    %336 = arith.addf %327, %335 : vector<4x256xf32>
    %c0_145 = arith.constant 0 : index
    %c143 = arith.constant 143 : index
    %337 = vector.load %arg5[%c0_145, %c143] : memref<1x512xf32, #tpu.memory_space<vmem>>, vector<1x256xf32>
    %cst_146 = arith.constant 0.000000e+00 : f32
    %338 = vector.broadcast %cst_146 : f32 to vector<1x256xf32>
    %339 = arith.select %47, %337, %338 : vector<1x256xi1>, vector<1x256xf32>
    %c30 = arith.constant 30 : index
    %c0_147 = arith.constant 0 : index
    %c0_148 = arith.constant 0 : index
    %340 = vector.load %arg2[%c30, %c0_147, %c0_148] : memref<49x4x1xf32, #tpu.memory_space<vmem>>, vector<1x4x1xf32>
    %341 = vector.shape_cast %340 : vector<1x4x1xf32> to vector<4x1xf32>
    %342 = vector.broadcast %341 : vector<4x1xf32> to vector<4x256xf32>
    %343 = vector.broadcast %339 : vector<1x256xf32> to vector<4x256xf32>
    %344 = arith.mulf %342, %343 : vector<4x256xf32>
    %345 = arith.addf %336, %344 : vector<4x256xf32>
    %c0_149 = arith.constant 0 : index
    %c144 = arith.constant 144 : index
    %346 = vector.load %arg5[%c0_149, %c144] : memref<1x512xf32, #tpu.memory_space<vmem>>, vector<1x256xf32>
    %c31 = arith.constant 31 : index
    %c0_150 = arith.constant 0 : index
    %c0_151 = arith.constant 0 : index
    %347 = vector.load %arg2[%c31, %c0_150, %c0_151] : memref<49x4x1xf32, #tpu.memory_space<vmem>>, vector<1x4x1xf32>
    %348 = vector.shape_cast %347 : vector<1x4x1xf32> to vector<4x1xf32>
    %349 = vector.broadcast %348 : vector<4x1xf32> to vector<4x256xf32>
    %350 = vector.broadcast %346 : vector<1x256xf32> to vector<4x256xf32>
    %351 = arith.mulf %349, %350 : vector<4x256xf32>
    %352 = arith.addf %345, %351 : vector<4x256xf32>
    %c0_152 = arith.constant 0 : index
    %c145 = arith.constant 145 : index
    %353 = vector.load %arg5[%c0_152, %c145] : memref<1x512xf32, #tpu.memory_space<vmem>>, vector<1x256xf32>
    %cst_153 = arith.constant 0.000000e+00 : f32
    %354 = vector.broadcast %cst_153 : f32 to vector<1x256xf32>
    %355 = arith.select %56, %353, %354 : vector<1x256xi1>, vector<1x256xf32>
    %c32 = arith.constant 32 : index
    %c0_154 = arith.constant 0 : index
    %c0_155 = arith.constant 0 : index
    %356 = vector.load %arg2[%c32, %c0_154, %c0_155] : memref<49x4x1xf32, #tpu.memory_space<vmem>>, vector<1x4x1xf32>
    %357 = vector.shape_cast %356 : vector<1x4x1xf32> to vector<4x1xf32>
    %358 = vector.broadcast %357 : vector<4x1xf32> to vector<4x256xf32>
    %359 = vector.broadcast %355 : vector<1x256xf32> to vector<4x256xf32>
    %360 = arith.mulf %358, %359 : vector<4x256xf32>
    %361 = arith.addf %352, %360 : vector<4x256xf32>
    %c0_156 = arith.constant 0 : index
    %c146 = arith.constant 146 : index
    %362 = vector.load %arg5[%c0_156, %c146] : memref<1x512xf32, #tpu.memory_space<vmem>>, vector<1x256xf32>
    %cst_157 = arith.constant 0.000000e+00 : f32
    %363 = vector.broadcast %cst_157 : f32 to vector<1x256xf32>
    %364 = arith.select %65, %362, %363 : vector<1x256xi1>, vector<1x256xf32>
    %c33 = arith.constant 33 : index
    %c0_158 = arith.constant 0 : index
    %c0_159 = arith.constant 0 : index
    %365 = vector.load %arg2[%c33, %c0_158, %c0_159] : memref<49x4x1xf32, #tpu.memory_space<vmem>>, vector<1x4x1xf32>
    %366 = vector.shape_cast %365 : vector<1x4x1xf32> to vector<4x1xf32>
    %367 = vector.broadcast %366 : vector<4x1xf32> to vector<4x256xf32>
    %368 = vector.broadcast %364 : vector<1x256xf32> to vector<4x256xf32>
    %369 = arith.mulf %367, %368 : vector<4x256xf32>
    %370 = arith.addf %361, %369 : vector<4x256xf32>
    %c0_160 = arith.constant 0 : index
    %c147 = arith.constant 147 : index
    %371 = vector.load %arg5[%c0_160, %c147] : memref<1x512xf32, #tpu.memory_space<vmem>>, vector<1x256xf32>
    %cst_161 = arith.constant 0.000000e+00 : f32
    %372 = vector.broadcast %cst_161 : f32 to vector<1x256xf32>
    %373 = arith.select %74, %371, %372 : vector<1x256xi1>, vector<1x256xf32>
    %c34 = arith.constant 34 : index
    %c0_162 = arith.constant 0 : index
    %c0_163 = arith.constant 0 : index
    %374 = vector.load %arg2[%c34, %c0_162, %c0_163] : memref<49x4x1xf32, #tpu.memory_space<vmem>>, vector<1x4x1xf32>
    %375 = vector.shape_cast %374 : vector<1x4x1xf32> to vector<4x1xf32>
    %376 = vector.broadcast %375 : vector<4x1xf32> to vector<4x256xf32>
    %377 = vector.broadcast %373 : vector<1x256xf32> to vector<4x256xf32>
    %378 = arith.mulf %376, %377 : vector<4x256xf32>
    %379 = arith.addf %370, %378 : vector<4x256xf32>
    %c0_164 = arith.constant 0 : index
    %c157 = arith.constant 157 : index
    %380 = vector.load %arg5[%c0_164, %c157] : memref<1x512xf32, #tpu.memory_space<vmem>>, vector<1x256xf32>
    %cst_165 = arith.constant 0.000000e+00 : f32
    %381 = vector.broadcast %cst_165 : f32 to vector<1x256xf32>
    %382 = arith.select %29, %380, %381 : vector<1x256xi1>, vector<1x256xf32>
    %c35 = arith.constant 35 : index
    %c0_166 = arith.constant 0 : index
    %c0_167 = arith.constant 0 : index
    %383 = vector.load %arg2[%c35, %c0_166, %c0_167] : memref<49x4x1xf32, #tpu.memory_space<vmem>>, vector<1x4x1xf32>
    %384 = vector.shape_cast %383 : vector<1x4x1xf32> to vector<4x1xf32>
    %385 = vector.broadcast %384 : vector<4x1xf32> to vector<4x256xf32>
    %386 = vector.broadcast %382 : vector<1x256xf32> to vector<4x256xf32>
    %387 = arith.mulf %385, %386 : vector<4x256xf32>
    %388 = arith.addf %379, %387 : vector<4x256xf32>
    %c0_168 = arith.constant 0 : index
    %c158 = arith.constant 158 : index
    %389 = vector.load %arg5[%c0_168, %c158] : memref<1x512xf32, #tpu.memory_space<vmem>>, vector<1x256xf32>
    %cst_169 = arith.constant 0.000000e+00 : f32
    %390 = vector.broadcast %cst_169 : f32 to vector<1x256xf32>
    %391 = arith.select %38, %389, %390 : vector<1x256xi1>, vector<1x256xf32>
    %c36 = arith.constant 36 : index
    %c0_170 = arith.constant 0 : index
    %c0_171 = arith.constant 0 : index
    %392 = vector.load %arg2[%c36, %c0_170, %c0_171] : memref<49x4x1xf32, #tpu.memory_space<vmem>>, vector<1x4x1xf32>
    %393 = vector.shape_cast %392 : vector<1x4x1xf32> to vector<4x1xf32>
    %394 = vector.broadcast %393 : vector<4x1xf32> to vector<4x256xf32>
    %395 = vector.broadcast %391 : vector<1x256xf32> to vector<4x256xf32>
    %396 = arith.mulf %394, %395 : vector<4x256xf32>
    %397 = arith.addf %388, %396 : vector<4x256xf32>
    %c0_172 = arith.constant 0 : index
    %c159 = arith.constant 159 : index
    %398 = vector.load %arg5[%c0_172, %c159] : memref<1x512xf32, #tpu.memory_space<vmem>>, vector<1x256xf32>
    %cst_173 = arith.constant 0.000000e+00 : f32
    %399 = vector.broadcast %cst_173 : f32 to vector<1x256xf32>
    %400 = arith.select %47, %398, %399 : vector<1x256xi1>, vector<1x256xf32>
    %c37 = arith.constant 37 : index
    %c0_174 = arith.constant 0 : index
    %c0_175 = arith.constant 0 : index
    %401 = vector.load %arg2[%c37, %c0_174, %c0_175] : memref<49x4x1xf32, #tpu.memory_space<vmem>>, vector<1x4x1xf32>
    %402 = vector.shape_cast %401 : vector<1x4x1xf32> to vector<4x1xf32>
    %403 = vector.broadcast %402 : vector<4x1xf32> to vector<4x256xf32>
    %404 = vector.broadcast %400 : vector<1x256xf32> to vector<4x256xf32>
    %405 = arith.mulf %403, %404 : vector<4x256xf32>
    %406 = arith.addf %397, %405 : vector<4x256xf32>
    %c0_176 = arith.constant 0 : index
    %c160 = arith.constant 160 : index
    %407 = vector.load %arg5[%c0_176, %c160] : memref<1x512xf32, #tpu.memory_space<vmem>>, vector<1x256xf32>
    %c38 = arith.constant 38 : index
    %c0_177 = arith.constant 0 : index
    %c0_178 = arith.constant 0 : index
    %408 = vector.load %arg2[%c38, %c0_177, %c0_178] : memref<49x4x1xf32, #tpu.memory_space<vmem>>, vector<1x4x1xf32>
    %409 = vector.shape_cast %408 : vector<1x4x1xf32> to vector<4x1xf32>
    %410 = vector.broadcast %409 : vector<4x1xf32> to vector<4x256xf32>
    %411 = vector.broadcast %407 : vector<1x256xf32> to vector<4x256xf32>
    %412 = arith.mulf %410, %411 : vector<4x256xf32>
    %413 = arith.addf %406, %412 : vector<4x256xf32>
    %c0_179 = arith.constant 0 : index
    %c161 = arith.constant 161 : index
    %414 = vector.load %arg5[%c0_179, %c161] : memref<1x512xf32, #tpu.memory_space<vmem>>, vector<1x256xf32>
    %cst_180 = arith.constant 0.000000e+00 : f32
    %415 = vector.broadcast %cst_180 : f32 to vector<1x256xf32>
    %416 = arith.select %56, %414, %415 : vector<1x256xi1>, vector<1x256xf32>
    %c39 = arith.constant 39 : index
    %c0_181 = arith.constant 0 : index
    %c0_182 = arith.constant 0 : index
    %417 = vector.load %arg2[%c39, %c0_181, %c0_182] : memref<49x4x1xf32, #tpu.memory_space<vmem>>, vector<1x4x1xf32>
    %418 = vector.shape_cast %417 : vector<1x4x1xf32> to vector<4x1xf32>
    %419 = vector.broadcast %418 : vector<4x1xf32> to vector<4x256xf32>
    %420 = vector.broadcast %416 : vector<1x256xf32> to vector<4x256xf32>
    %421 = arith.mulf %419, %420 : vector<4x256xf32>
    %422 = arith.addf %413, %421 : vector<4x256xf32>
    %c0_183 = arith.constant 0 : index
    %c162 = arith.constant 162 : index
    %423 = vector.load %arg5[%c0_183, %c162] : memref<1x512xf32, #tpu.memory_space<vmem>>, vector<1x256xf32>
    %cst_184 = arith.constant 0.000000e+00 : f32
    %424 = vector.broadcast %cst_184 : f32 to vector<1x256xf32>
    %425 = arith.select %65, %423, %424 : vector<1x256xi1>, vector<1x256xf32>
    %c40 = arith.constant 40 : index
    %c0_185 = arith.constant 0 : index
    %c0_186 = arith.constant 0 : index
    %426 = vector.load %arg2[%c40, %c0_185, %c0_186] : memref<49x4x1xf32, #tpu.memory_space<vmem>>, vector<1x4x1xf32>
    %427 = vector.shape_cast %426 : vector<1x4x1xf32> to vector<4x1xf32>
    %428 = vector.broadcast %427 : vector<4x1xf32> to vector<4x256xf32>
    %429 = vector.broadcast %425 : vector<1x256xf32> to vector<4x256xf32>
    %430 = arith.mulf %428, %429 : vector<4x256xf32>
    %431 = arith.addf %422, %430 : vector<4x256xf32>
    %c0_187 = arith.constant 0 : index
    %c163 = arith.constant 163 : index
    %432 = vector.load %arg5[%c0_187, %c163] : memref<1x512xf32, #tpu.memory_space<vmem>>, vector<1x256xf32>
    %cst_188 = arith.constant 0.000000e+00 : f32
    %433 = vector.broadcast %cst_188 : f32 to vector<1x256xf32>
    %434 = arith.select %74, %432, %433 : vector<1x256xi1>, vector<1x256xf32>
    %c41 = arith.constant 41 : index
    %c0_189 = arith.constant 0 : index
    %c0_190 = arith.constant 0 : index
    %435 = vector.load %arg2[%c41, %c0_189, %c0_190] : memref<49x4x1xf32, #tpu.memory_space<vmem>>, vector<1x4x1xf32>
    %436 = vector.shape_cast %435 : vector<1x4x1xf32> to vector<4x1xf32>
    %437 = vector.broadcast %436 : vector<4x1xf32> to vector<4x256xf32>
    %438 = vector.broadcast %434 : vector<1x256xf32> to vector<4x256xf32>
    %439 = arith.mulf %437, %438 : vector<4x256xf32>
    %440 = arith.addf %431, %439 : vector<4x256xf32>
    %c0_191 = arith.constant 0 : index
    %c173 = arith.constant 173 : index
    %441 = vector.load %arg5[%c0_191, %c173] : memref<1x512xf32, #tpu.memory_space<vmem>>, vector<1x256xf32>
    %cst_192 = arith.constant 0.000000e+00 : f32
    %442 = vector.broadcast %cst_192 : f32 to vector<1x256xf32>
    %443 = arith.select %29, %441, %442 : vector<1x256xi1>, vector<1x256xf32>
    %c42 = arith.constant 42 : index
    %c0_193 = arith.constant 0 : index
    %c0_194 = arith.constant 0 : index
    %444 = vector.load %arg2[%c42, %c0_193, %c0_194] : memref<49x4x1xf32, #tpu.memory_space<vmem>>, vector<1x4x1xf32>
    %445 = vector.shape_cast %444 : vector<1x4x1xf32> to vector<4x1xf32>
    %446 = vector.broadcast %445 : vector<4x1xf32> to vector<4x256xf32>
    %447 = vector.broadcast %443 : vector<1x256xf32> to vector<4x256xf32>
    %448 = arith.mulf %446, %447 : vector<4x256xf32>
    %449 = arith.addf %440, %448 : vector<4x256xf32>
    %c0_195 = arith.constant 0 : index
    %c174 = arith.constant 174 : index
    %450 = vector.load %arg5[%c0_195, %c174] : memref<1x512xf32, #tpu.memory_space<vmem>>, vector<1x256xf32>
    %cst_196 = arith.constant 0.000000e+00 : f32
    %451 = vector.broadcast %cst_196 : f32 to vector<1x256xf32>
    %452 = arith.select %38, %450, %451 : vector<1x256xi1>, vector<1x256xf32>
    %c43 = arith.constant 43 : index
    %c0_197 = arith.constant 0 : index
    %c0_198 = arith.constant 0 : index
    %453 = vector.load %arg2[%c43, %c0_197, %c0_198] : memref<49x4x1xf32, #tpu.memory_space<vmem>>, vector<1x4x1xf32>
    %454 = vector.shape_cast %453 : vector<1x4x1xf32> to vector<4x1xf32>
    %455 = vector.broadcast %454 : vector<4x1xf32> to vector<4x256xf32>
    %456 = vector.broadcast %452 : vector<1x256xf32> to vector<4x256xf32>
    %457 = arith.mulf %455, %456 : vector<4x256xf32>
    %458 = arith.addf %449, %457 : vector<4x256xf32>
    %c0_199 = arith.constant 0 : index
    %c175 = arith.constant 175 : index
    %459 = vector.load %arg5[%c0_199, %c175] : memref<1x512xf32, #tpu.memory_space<vmem>>, vector<1x256xf32>
    %cst_200 = arith.constant 0.000000e+00 : f32
    %460 = vector.broadcast %cst_200 : f32 to vector<1x256xf32>
    %461 = arith.select %47, %459, %460 : vector<1x256xi1>, vector<1x256xf32>
    %c44 = arith.constant 44 : index
    %c0_201 = arith.constant 0 : index
    %c0_202 = arith.constant 0 : index
    %462 = vector.load %arg2[%c44, %c0_201, %c0_202] : memref<49x4x1xf32, #tpu.memory_space<vmem>>, vector<1x4x1xf32>
    %463 = vector.shape_cast %462 : vector<1x4x1xf32> to vector<4x1xf32>
    %464 = vector.broadcast %463 : vector<4x1xf32> to vector<4x256xf32>
    %465 = vector.broadcast %461 : vector<1x256xf32> to vector<4x256xf32>
    %466 = arith.mulf %464, %465 : vector<4x256xf32>
    %467 = arith.addf %458, %466 : vector<4x256xf32>
    %c0_203 = arith.constant 0 : index
    %c176 = arith.constant 176 : index
    %468 = vector.load %arg5[%c0_203, %c176] : memref<1x512xf32, #tpu.memory_space<vmem>>, vector<1x256xf32>
    %c45 = arith.constant 45 : index
    %c0_204 = arith.constant 0 : index
    %c0_205 = arith.constant 0 : index
    %469 = vector.load %arg2[%c45, %c0_204, %c0_205] : memref<49x4x1xf32, #tpu.memory_space<vmem>>, vector<1x4x1xf32>
    %470 = vector.shape_cast %469 : vector<1x4x1xf32> to vector<4x1xf32>
    %471 = vector.broadcast %470 : vector<4x1xf32> to vector<4x256xf32>
    %472 = vector.broadcast %468 : vector<1x256xf32> to vector<4x256xf32>
    %473 = arith.mulf %471, %472 : vector<4x256xf32>
    %474 = arith.addf %467, %473 : vector<4x256xf32>
    %c0_206 = arith.constant 0 : index
    %c177 = arith.constant 177 : index
    %475 = vector.load %arg5[%c0_206, %c177] : memref<1x512xf32, #tpu.memory_space<vmem>>, vector<1x256xf32>
    %cst_207 = arith.constant 0.000000e+00 : f32
    %476 = vector.broadcast %cst_207 : f32 to vector<1x256xf32>
    %477 = arith.select %56, %475, %476 : vector<1x256xi1>, vector<1x256xf32>
    %c46 = arith.constant 46 : index
    %c0_208 = arith.constant 0 : index
    %c0_209 = arith.constant 0 : index
    %478 = vector.load %arg2[%c46, %c0_208, %c0_209] : memref<49x4x1xf32, #tpu.memory_space<vmem>>, vector<1x4x1xf32>
    %479 = vector.shape_cast %478 : vector<1x4x1xf32> to vector<4x1xf32>
    %480 = vector.broadcast %479 : vector<4x1xf32> to vector<4x256xf32>
    %481 = vector.broadcast %477 : vector<1x256xf32> to vector<4x256xf32>
    %482 = arith.mulf %480, %481 : vector<4x256xf32>
    %483 = arith.addf %474, %482 : vector<4x256xf32>
    %c0_210 = arith.constant 0 : index
    %c178 = arith.constant 178 : index
    %484 = vector.load %arg5[%c0_210, %c178] : memref<1x512xf32, #tpu.memory_space<vmem>>, vector<1x256xf32>
    %cst_211 = arith.constant 0.000000e+00 : f32
    %485 = vector.broadcast %cst_211 : f32 to vector<1x256xf32>
    %486 = arith.select %65, %484, %485 : vector<1x256xi1>, vector<1x256xf32>
    %c47 = arith.constant 47 : index
    %c0_212 = arith.constant 0 : index
    %c0_213 = arith.constant 0 : index
    %487 = vector.load %arg2[%c47, %c0_212, %c0_213] : memref<49x4x1xf32, #tpu.memory_space<vmem>>, vector<1x4x1xf32>
    %488 = vector.shape_cast %487 : vector<1x4x1xf32> to vector<4x1xf32>
    %489 = vector.broadcast %488 : vector<4x1xf32> to vector<4x256xf32>
    %490 = vector.broadcast %486 : vector<1x256xf32> to vector<4x256xf32>
    %491 = arith.mulf %489, %490 : vector<4x256xf32>
    %492 = arith.addf %483, %491 : vector<4x256xf32>
    %c0_214 = arith.constant 0 : index
    %c179 = arith.constant 179 : index
    %493 = vector.load %arg5[%c0_214, %c179] : memref<1x512xf32, #tpu.memory_space<vmem>>, vector<1x256xf32>
    %cst_215 = arith.constant 0.000000e+00 : f32
    %494 = vector.broadcast %cst_215 : f32 to vector<1x256xf32>
    %495 = arith.select %74, %493, %494 : vector<1x256xi1>, vector<1x256xf32>
    %c48 = arith.constant 48 : index
    %c0_216 = arith.constant 0 : index
    %c0_217 = arith.constant 0 : index
    %496 = vector.load %arg2[%c48, %c0_216, %c0_217] : memref<49x4x1xf32, #tpu.memory_space<vmem>>, vector<1x4x1xf32>
    %497 = vector.shape_cast %496 : vector<1x4x1xf32> to vector<4x1xf32>
    %498 = vector.broadcast %497 : vector<4x1xf32> to vector<4x256xf32>
    %499 = vector.broadcast %495 : vector<1x256xf32> to vector<4x256xf32>
    %500 = arith.mulf %498, %499 : vector<4x256xf32>
    %501 = arith.addf %492, %500 : vector<4x256xf32>
    %c0_218 = arith.constant 0 : index
    %c0_219 = arith.constant 0 : index
    %502 = vector.load %arg3[%c0_218, %c0_219] : memref<4x1xf32, #tpu.memory_space<vmem>>, vector<4x1xf32>
    %503 = vector.broadcast %502 : vector<4x1xf32> to vector<4x256xf32>
    %504 = arith.addf %501, %503 : vector<4x256xf32>
    %c0_220 = arith.constant 0 : index
    %c0_221 = arith.constant 0 : index
    %c0_222 = arith.constant 0 : index
    %505 = vector.load %arg4[%c0_220, %c0_221, %c0_222] : memref<1x4x256xf32, #tpu.memory_space<vmem>>, vector<1x4x256xf32>
    %506 = vector.shape_cast %505 : vector<1x4x256xf32> to vector<4x256xf32>
    %507 = vector.shape_cast %504 : vector<4x256xf32> to vector<1x4x256xf32>
    tpu.vector_store %arg4[%c0_220, %c0_221, %c0_222], %507 {strides = array<i32>} : memref<1x4x256xf32, #tpu.memory_space<vmem>>, vector<1x4x256xf32>,
    return
  }
  func.func @transform_0(%arg0: i32) -> (i32, i32, i32) {
    %c0_i32 = arith.constant 0 : i32
    %c0_i32_0 = arith.constant 0 : i32
    %c0_i32_1 = arith.constant 0 : i32
    return %arg0, %c0_i32, %c0_i32_0 : i32, i32, i32
  }
  func.func @transform_1(%arg0: i32) -> (i32, i32, i32) {
    %c0_i32 = arith.constant 0 : i32
    %c0_i32_0 = arith.constant 0 : i32
    %c0_i32_1 = arith.constant 0 : i32
    %c0_i32_2 = arith.constant 0 : i32
    return %c0_i32, %c0_i32_0, %c0_i32_1 : i32, i32, i32
  }
  func.func @transform_2(%arg0: i32) -> (i32, i32) {
    %c0_i32 = arith.constant 0 : i32
    %c0_i32_0 = arith.constant 0 : i32
    %c0_i32_1 = arith.constant 0 : i32
    return %c0_i32, %c0_i32_0 : i32, i32
  }
  func.func @transform_3(%arg0: i32) -> (i32, i32, i32) {
    %c0_i32 = arith.constant 0 : i32
    %c0_i32_0 = arith.constant 0 : i32
    %c0_i32_1 = arith.constant 0 : i32
    return %arg0, %c0_i32, %c0_i32_0 : i32, i32, i32
  }
}

</mosaic_0001>

<llo_original>
// kernel: tpu_custom_call.1
$region0: #{tpu_custom_call.1}
  #allocation0 [shape = 'u32[]', space=smem, size = 0x4, offset = 0x4, fixed_abs, tag = 'smem constant byte address 0x4 - core index']
  #allocation1 [shape = 'u32[144,128]{1,0:T(1,128)}', space=vmem, size = 0x12000, scoped, tag = 'internal scratch']
  #allocation2 [shape = 'f32[1,512]{1,0:T(1,128)}', space=vmem, size = 0x800, scoped, tag = 'scratch operand']
  %s0 = inlined_call_operand.vmem [shape: f32[2,1,256], index: 0, kind: input, shape index: {}]
  %s1 = inlined_call_operand.vmem [shape: f32[49,4,1], index: 1, kind: input, shape index: {}]
  %s2 = inlined_call_operand.vmem [shape: f32[4,1], index: 2, kind: input, shape index: {}]
  %s3 = inlined_call_operand.hbm [shape: f32[2,4,256], index: 3, kind: output, shape index: {}]
  %s4 = sld [smem:[#allocation0]]
  $region45: #{tpu_custom_call.1} parent=0
    _
  %s6 = ssub.s32 1, %s4
  %s7 = scalar_select 0, %s6, %s4
  $region1: #{tpu_custom_call.1} parent=0
    #allocation3 [shape = 'u8[8192]{0}', space=vmem, size = 0x2000, scoped, tag = 'output window, operand 0']
    #allocation4 [shape = 's32[2]{0}', space=sflag, size = 0x8, scoped, tag = 'scoped memory for tpu_custom_call.1']
    %8 = vsyncpa [#allocation4], 0
    %s9 = scalar_lea.sflag [#allocation4], 1
    %10 = vsyncpa %s9, 0
    loop: start=0, step=1, limit=4
    $region2: #{tpu_custom_call.1} parent=1 // loop_pre_header
      _
    $region3: #{tpu_custom_call.1} parent=1 // loop_header
      %s12 = sphi 0, %s16
      %p13 = scmp.ge.s32.totalorder %s12, 4
      %s22 = sphi 0, %s24
      %s25 = sphi 0, %s22
      %s26 = sphi 0, %s25
      %s42 = sphi 0, %s26
      %s46 = sphi 0, %s46
      %s48 = sphi 0, %s46
      %s49 = sphi 0, %s48
      %s63 = sphi 0, %s49
      %s67 = sphi 0, %s67
      %s69 = sphi 0, %s67
      %s70 = sphi 0, %s69
      %s84 = sphi 0, %s70
      %s90 = sphi 0, %s92
      %s93 = sphi 0, %s90
      %s94 = sphi 0, %s93
      %s110 = sphi 0, %s94
    $region4: #{tpu_custom_call.1} parent=1 // loop_header_branch
      %15 = sbr.rel (%p13) target = $region8
    $region5: #{tpu_custom_call.1} parent=1 // loop_body
      %s17 = ssub.s32 %s12, 1
      %s18 = ssub.s32 %s12, 2
      %s19 = sadd.s32 %s12, 1
      %s20 = ssub.s32 %s12, %s19
      %p21 = scmp.eq.s32.totalorder %s20, 0
      %s23 = sadd.s32 %s22, 1
      %s24 = scalar_select %p21, %s22, %s23
      %p27 = pneg %p21
      %p28 = scmp.eq.s32.totalorder %s12, 1
      %p29 = por %p27, %p28
      %p30 = scmp.ne.s32.totalorder %s22, %s25
      %p31 = scmp.eq.s32.totalorder %s12, 0
      %p32 = por %p30, %p31
      %p33 = scmp.ne.s32.totalorder %s22, %s25
      %p34 = scmp.eq.s32.totalorder %s17, 1
      %p35 = por %p33, %p34
      %p36 = scmp.ne.s32.totalorder %s25, %s26
      %p37 = scmp.eq.s32.totalorder %s17, 0
      %p38 = por %p36, %p37
      %p39 = scmp.ne.s32.totalorder %s25, %s26
      %p40 = scmp.eq.s32.totalorder %s18, 1
      %p41 = por %p39, %p40
      %p43 = scmp.ne.s32.totalorder %s26, %s42
      %p44 = scmp.eq.s32.totalorder %s18, 0
      %p45 = por %p43, %p44
      %s47 = sadd.s32 %s46, 1
      %p50 = scmp.eq.s32.totalorder %s12, 1
      %p51 = scmp.ne.s32.totalorder %s46, %s48
      %p52 = scmp.eq.s32.totalorder %s12, 0
      %p53 = por %p51, %p52
      %p54 = scmp.ne.s32.totalorder %s46, %s48
      %p55 = scmp.eq.s32.totalorder %s17, 1
      %p56 = por %p54, %p55
      %p57 = scmp.ne.s32.totalorder %s48, %s49
      %p58 = scmp.eq.s32.totalorder %s17, 0
      %p59 = por %p57, %p58
      %p60 = scmp.ne.s32.totalorder %s48, %s49
      %p61 = scmp.eq.s32.totalorder %s18, 1
      %p62 = por %p60, %p61
      %p64 = scmp.ne.s32.totalorder %s49, %s63
      %p65 = scmp.eq.s32.totalorder %s18, 0
      %p66 = por %p64, %p65
      %s68 = sadd.s32 %s67, 1
      %p71 = scmp.eq.s32.totalorder %s12, 1
      %p72 = scmp.ne.s32.totalorder %s67, %s69
      %p73 = scmp.eq.s32.totalorder %s12, 0
      %p74 = por %p72, %p73
      %p75 = scmp.ne.s32.totalorder %s67, %s69
      %p76 = scmp.eq.s32.totalorder %s17, 1
      %p77 = por %p75, %p76
      %p78 = scmp.ne.s32.totalorder %s69, %s70
      %p79 = scmp.eq.s32.totalorder %s17, 0
      %p80 = por %p78, %p79
      %p81 = scmp.ne.s32.totalorder %s69, %s70
      %p82 = scmp.eq.s32.totalorder %s18, 1
      %p83 = por %p81, %p82
      %p85 = scmp.ne.s32.totalorder %s70, %s84
      %p86 = scmp.eq.s32.totalorder %s18, 0
      %p87 = por %p85, %p86
      %s88 = ssub.s32 %s12, %s19
      %p89 = scmp.eq.s32.totalorder %s88, 0
      %s91 = sadd.s32 %s90, 1
      %s92 = scalar_select %p89, %s90, %s91
      %p95 = pneg %p89
      %p96 = scmp.eq.s32.totalorder %s12, 1
      %p97 = por %p95, %p96
      %p98 = scmp.ne.s32.totalorder %s90, %s93
      %p99 = scmp.eq.s32.totalorder %s12, 0
      %p100 = por %p98, %p99
      %p101 = scmp.ne.s32.totalorder %s90, %s93
      %p102 = scmp.eq.s32.totalorder %s17, 1
      %p103 = por %p101, %p102
      %p104 = scmp.ne.s32.totalorder %s93, %s94
      %p105 = scmp.eq.s32.totalorder %s17, 0
      %p106 = por %p104, %p105
      %p107 = scmp.ne.s32.totalorder %s93, %s94
      %p108 = scmp.eq.s32.totalorder %s18, 1
      %p109 = por %p107, %p108
      %p111 = scmp.ne.s32.totalorder %s94, %s110
      %p112 = scmp.eq.s32.totalorder %s18, 0
      %p113 = por %p111, %p112
      %p114 = scmp.le.s32.totalorder 1, %s12
      %p115 = scmp.lt.s32.totalorder %s12, 3
      %p116 = pnand %p114, %p115
      %p117 = pneg %p116
      // Predicated region
      $region9: #{tpu_custom_call.1} parent=5 // pred_check
        _
      $region10: #{tpu_custom_call.1} parent=5 // pred_check_branch
        %119 = sbr.rel (%p116) target = $region12
      $region11: #{tpu_custom_call.1} parent=5 // pred_region
        %s120 = ssub.s32 %s12, 1
        // Predicated region
        $region13: #{tpu_custom_call.1} parent=11 // pred_check
          %p121 = pneg %p59
        $region14: #{tpu_custom_call.1} parent=11 // pred_check_branch
          %123 = sbr.rel (%p121) target = $region16
        $region15: #{tpu_custom_call.1} parent=11 // pred_region
          _
        $region16: #{tpu_custom_call.1} parent=11 // pred_fallthru
          _
        // Predicated region
        $region17: #{tpu_custom_call.1} parent=11 // pred_check
          %p124 = pneg %p80
        $region18: #{tpu_custom_call.1} parent=11 // pred_check_branch
          %126 = sbr.rel (%p124) target = $region20
        $region19: #{tpu_custom_call.1} parent=11 // pred_region
          _
        $region20: #{tpu_custom_call.1} parent=11 // pred_fallthru
          _
      $region12: #{tpu_custom_call.1} parent=5 // pred_fallthru
        _
      %p127 = scmp.lt.s32.totalorder %s12, 2
      // Predicated region
      $region21: #{tpu_custom_call.1} parent=5 // pred_check
        %p128 = pneg %p127
      $region22: #{tpu_custom_call.1} parent=5 // pred_check_branch
        %130 = sbr.rel (%p128) target = $region24
      $region23: #{tpu_custom_call.1} parent=5 // pred_region
        // Predicated region
        $region25: #{tpu_custom_call.1} parent=23 // pred_check
          %p131 = pneg %p32
        $region26: #{tpu_custom_call.1} parent=23 // pred_check_branch
          %133 = sbr.rel (%p131) target = $region28
        $region27: #{tpu_custom_call.1} parent=23 // pred_region
          %p134 = scmp.lt.s32.totalorder %s12, 1
          %s135 = scalar_select %p134, %s12, 1
          %s136 = smul.addr %s135, 2
          %s137 = scalar_lea.vmem %s0, %s136
        $region28: #{tpu_custom_call.1} parent=23 // pred_fallthru
          _
      $region24: #{tpu_custom_call.1} parent=5 // pred_fallthru
        _
      %p138 = scmp.le.s32.totalorder 1, %s12
      %p139 = scmp.lt.s32.totalorder %s12, 3
      %p140 = pnand %p138, %p139
      %p141 = pneg %p140
      // Predicated region
      $region29: #{tpu_custom_call.1} parent=5 // pred_check
        _
      $region30: #{tpu_custom_call.1} parent=5 // pred_check_branch
        %143 = sbr.rel (%p140) target = $region32
      $region31: #{tpu_custom_call.1} parent=5 // pred_region
        %s144 = ssub.s32 %s12, 1
        %p145 = scmp.lt.s32.totalorder %s17, 1
        %s146 = scalar_select %p145, %s17, 1
        %s147 = smul.addr %s146, 2
        %s148 = scalar_lea.vmem %s0, %s147
        %p149 = pneg %p38
        %p150 = pneg %p35
        %p151 = pneg %p59
        %p152 = pneg %p56
        %p153 = pneg %p80
        %p154 = pneg %p77
        %p155 = pneg %p106
        %p156 = pneg %p103
        %s157 = sand.u32 %s93, 1
        %s158 = scalar_lea.sflag [#allocation4], %s157
        %s159 = sand.u32 %s93, 1
        %s160 = smul.addr %s159, 8
        %s161 = scalar_lea.vmem [#allocation3], %s160
        %p162 = scmp.lt.s32.totalorder %s17, 1
        %s163 = scalar_select %p162, %s17, 1
        %s164 = smul.addr %s163, 2
        %s165 = scalar_lea.vmem %s0, %s164
        %v166 = vlaneseq
        %vm167 = vcmp.ge.s32.totalorder %v166, 0
        %vm168 = vcmp.lt.s32.totalorder %v166, 512
        %vm169 = vmand %vm167, %vm168
        %170 = vst.msk [vmem:[#allocation2] sm:$0xf] %vm169, 0.0
        %v171 = vld [vmem:[%s165] sm:$0x3]
        %v172 = vlaneseq
        %v173 = vand.u32 %v172, 127
        %v174 = vadd.s32 %v173, 128
        %vm175 = vcmp.lt.s32.totalorder %v173, 0
        %v176 = vsub.s32 0, %v173
        %v177 = vsel %vm175, %v176, %v173
        %v178 = vshrl.u32 %v177, 4
        %v179 = vand.u32 %v177, 15
        %v180 = vsub.s32 0, %v179
        %v181 = vsel %vm175, %v180, %v179
        %vm182 = vcmp.lt.s32.totalorder %v174, 0
        %v183 = vsub.s32 0, %v174
        %v184 = vsel %vm182, %v183, %v174
        %v185 = vshrl.u32 %v184, 4
        %v186 = vand.u32 %v184, 15
        %v187 = vsub.s32 0, %v186
        %v188 = vsel %vm182, %v187, %v186
        %vm189 = vcmp.ne.s32.totalorder %v181, 0
        %vm190 = vcmp.ne.s32.totalorder %v188, 0
        %vm191 = vcmp.lt.s32.totalorder %v181, 0
        %vm192 = vcmp.lt.s32.totalorder %v188, 0
        %vm193 = vmand %vm191, %vm189
        %vm194 = vmand %vm192, %vm190
        %v195 = vadd.s32 %v181, 16
        %v196 = vadd.s32 %v188, 16
        %v197 = vsel %vm193, %v195, %v181
        %v198 = vsel %vm194, %v196, %v188
        %v199 = vadd.s32 %v197, 4294967293
        %v200 = vadd.s32 %v198, 4294967293
        %vm201 = vcmp.ge.s32.totalorder %v199, 0
        %vm202 = vcmp.ge.s32.totalorder %v200, 0
        %vm203 = vcmp.lt.s32.totalorder %v199, 16
        %vm204 = vcmp.lt.s32.totalorder %v200, 16
        %vm205 = vmand %vm201, %vm203
        %vm206 = vmand %vm202, %vm204
        %v207 = vadd.s32 %v197, 4294967294
        %v208 = vadd.s32 %v198, 4294967294
        %vm209 = vcmp.ge.s32.totalorder %v207, 0
        %vm210 = vcmp.ge.s32.totalorder %v208, 0
        %vm211 = vcmp.lt.s32.totalorder %v207, 16
        %vm212 = vcmp.lt.s32.totalorder %v208, 16
        %vm213 = vmand %vm209, %vm211
        %vm214 = vmand %vm210, %vm212
        %v215 = vadd.s32 %v197, 4294967295
        %v216 = vadd.s32 %v198, 4294967295
        %vm217 = vcmp.ge.s32.totalorder %v215, 0
        %vm218 = vcmp.ge.s32.totalorder %v216, 0
        %vm219 = vcmp.lt.s32.totalorder %v215, 16
        %vm220 = vcmp.lt.s32.totalorder %v216, 16
        %vm221 = vmand %vm217, %vm219
        %vm222 = vmand %vm218, %vm220
        %v223 = vadd.s32 %v197, 1
        %v224 = vadd.s32 %v198, 1
        %vm225 = vcmp.ge.s32.totalorder %v223, 0
        %vm226 = vcmp.ge.s32.totalorder %v224, 0
        %vm227 = vcmp.lt.s32.totalorder %v223, 16
        %vm228 = vcmp.lt.s32.totalorder %v224, 16
        %vm229 = vmand %vm225, %vm227
        %vm230 = vmand %vm226, %vm228
        %v231 = vadd.s32 %v197, 2
        %v232 = vadd.s32 %v198, 2
        %vm233 = vcmp.ge.s32.totalorder %v231, 0
        %vm234 = vcmp.ge.s32.totalorder %v232, 0
        %vm235 = vcmp.lt.s32.totalorder %v231, 16
        %vm236 = vcmp.lt.s32.totalorder %v232, 16
        %vm237 = vmand %vm233, %vm235
        %vm238 = vmand %vm234, %vm236
        %v239 = vadd.s32 %v197, 3
        %v240 = vadd.s32 %v198, 3
        %vm241 = vcmp.ge.s32.totalorder %v239, 0
        %vm242 = vcmp.ge.s32.totalorder %v240, 0
        %vm243 = vcmp.lt.s32.totalorder %v239, 16
        %vm244 = vcmp.lt.s32.totalorder %v240, 16
        %vm245 = vmand %vm241, %vm243
        %vm246 = vmand %vm242, %vm244
        %vm247 = vcmp.lt.s32.totalorder %v166, 256
        %vm248 = vmand %vm167, %vm247
        %249 = vst.msk [vmem:[#allocation2 + $0x1] sm:$0x3] %vm248, %v171
        %v250 = vld [vmem:[#allocation2] sm:$0x7]
        %v252 = vlaneseq
        %v253 = vshrl.u32 %v252, 7
        %v254 = vsub.s32 0, %v253
        %v255 = vrot.slane %v250, %v254
        %v256 = vlaneseq
        %v257 = vshrl.u32 %v256, 7
        %v258 = vsub.s32 1, %v257
        %v259 = vrot.slane %v250, %v258
        %v260 = vlaneseq
        %v261 = vshrl.u32 %v260, 7
        %v262 = vsub.s32 2, %v261
        %v263 = vrot.slane %v250, %v262
        %264 = vrot.lane.b32.xlu0 %v255, 51
        %v265 = vpop.permute.xlu0 %264
        %266 = vrot.lane.b32.xlu0 %v259, 51
        %v267 = vpop.permute.xlu0 %266
        %268 = vrot.lane.b32.xlu0 %v263, 51
        %v269 = vpop.permute.xlu0 %268
        %vm270 = vcmask 416768
        %v271 = vsel %vm270, %v265, %v267
        %v272 = vsel %vm270, %v267, %v269
        %v275 = vsel %vm205, %v271, 0.0
        %v276 = vsel %vm206, %v272, 0.0
        %v277 = vld [vmem:[%s1] sm:$0xf]
        %279 = vset.pattern.permute.xlu0 0
        %280 = vperm.xlu0 %279, %v277
        %v281 = vpop.permute.xlu0 %280
        %v283 = vlaneseq
        %v284 = vshrl.u32 %v283, 7
        %v285 = vsub.s32 0, %v284
        %v286 = vrot.slane %v275, %v285
        %v287 = vlaneseq
        %v288 = vshrl.u32 %v287, 7
        %v289 = vsub.s32 0, %v288
        %v290 = vrot.slane %v276, %v289
        %v291 = vmul.f32 %v281, %v286
        %v292 = vmul.f32 %v281, %v290
        %293 = vrot.lane.b32.xlu0 %v255, 50
        %v294 = vpop.permute.xlu0 %293
        %295 = vrot.lane.b32.xlu0 %v259, 50
        %v296 = vpop.permute.xlu0 %295
        %297 = vrot.lane.b32.xlu0 %v263, 50
        %v298 = vpop.permute.xlu0 %297
        %vm299 = vcmask 408576
        %v300 = vsel %vm299, %v294, %v296
        %v301 = vsel %vm299, %v296, %v298
        %v304 = vsel %vm213, %v300, 0.0
        %v305 = vsel %vm214, %v301, 0.0
        %s306 = scalar_lea.vmem %s1, 4
        %v307 = vld [vmem:[%s306] sm:$0xf]
        %309 = vset.pattern.permute.xlu0 0
        %310 = vperm.xlu0 %309, %v307
        %v311 = vpop.permute.xlu0 %310
        %v313 = vlaneseq
        %v314 = vshrl.u32 %v313, 7
        %v315 = vsub.s32 0, %v314
        %v316 = vrot.slane %v304, %v315
        %v317 = vlaneseq
        %v318 = vshrl.u32 %v317, 7
        %v319 = vsub.s32 0, %v318
        %v320 = vrot.slane %v305, %v319
        %v321 = vmul.f32 %v311, %v316
        %v322 = vmul.f32 %v311, %v320
        %v323 = vadd.f32 %v291, %v321
        %v324 = vadd.f32 %v292, %v322
        %325 = vrot.lane.b32.xlu0 %v255, 49
        %v326 = vpop.permute.xlu0 %325
        %327 = vrot.lane.b32.xlu0 %v259, 49
        %v328 = vpop.permute.xlu0 %327
        %329 = vrot.lane.b32.xlu0 %v263, 49
        %v330 = vpop.permute.xlu0 %329
        %vm331 = vcmask 400384
        %v332 = vsel %vm331, %v326, %v328
        %v333 = vsel %vm331, %v328, %v330
        %v336 = vsel %vm221, %v332, 0.0
        %v337 = vsel %vm222, %v333, 0.0
        %s338 = scalar_lea.vmem %s1, 8
        %v339 = vld [vmem:[%s338] sm:$0xf]
        %341 = vset.pattern.permute.xlu0 0
        %342 = vperm.xlu0 %341, %v339
        %v343 = vpop.permute.xlu0 %342
        %v345 = vlaneseq
        %v346 = vshrl.u32 %v345, 7
        %v347 = vsub.s32 0, %v346
        %v348 = vrot.slane %v336, %v347
        %v349 = vlaneseq
        %v350 = vshrl.u32 %v349, 7
        %v351 = vsub.s32 0, %v350
        %v352 = vrot.slane %v337, %v351
        %v353 = vmul.f32 %v343, %v348
        %v354 = vmul.f32 %v343, %v352
        %v355 = vadd.f32 %v323, %v353
        %v356 = vadd.f32 %v324, %v354
        %s357 = scalar_lea.vmem %s1, 12
        %v358 = vld [vmem:[%s357] sm:$0xf]
        %360 = vset.pattern.permute.xlu0 0
        %361 = vperm.xlu0 %360, %v358
        %v362 = vpop.permute.xlu0 %361
        %v367 = vmul.f32 %v362, %v255
        %v368 = vmul.f32 %v362, %v259
        %v369 = vmul.f32 %v362, %v263
        %373 = vrot.lane.b32.xlu0 %v367, 48
        %v374 = vpop.permute.xlu0 %373
        %375 = vrot.lane.b32.xlu0 %v368, 48
        %v376 = vpop.permute.xlu0 %375
        %377 = vrot.lane.b32.xlu0 %v369, 48
        %v378 = vpop.permute.xlu0 %377
        %vm379 = vcmask 392192
        %v380 = vsel %vm379, %v374, %v376
        %v381 = vsel %vm379, %v376, %v378
        %v384 = vadd.f32 %v355, %v380
        %v385 = vadd.f32 %v356, %v381
        %386 = vrot.lane.b32.xlu0 %v255, 47
        %v387 = vpop.permute.xlu0 %386
        %388 = vrot.lane.b32.xlu0 %v259, 47
        %v389 = vpop.permute.xlu0 %388
        %390 = vrot.lane.b32.xlu0 %v263, 47
        %v391 = vpop.permute.xlu0 %390
        %vm392 = vcmask 384000
        %v393 = vsel %vm392, %v387, %v389
        %v394 = vsel %vm392, %v389, %v391
        %v397 = vsel %vm229, %v393, 0.0
        %v398 = vsel %vm230, %v394, 0.0
        %s399 = scalar_lea.vmem %s1, 16
        %v400 = vld [vmem:[%s399] sm:$0xf]
        %402 = vset.pattern.permute.xlu0 0
        %403 = vperm.xlu0 %402, %v400
        %v404 = vpop.permute.xlu0 %403
        %v406 = vlaneseq
        %v407 = vshrl.u32 %v406, 7
        %v408 = vsub.s32 0, %v407
        %v409 = vrot.slane %v397, %v408
        %v410 = vlaneseq
        %v411 = vshrl.u32 %v410, 7
        %v412 = vsub.s32 0, %v411
        %v413 = vrot.slane %v398, %v412
        %v414 = vmul.f32 %v404, %v409
        %v415 = vmul.f32 %v404, %v413
        %v416 = vadd.f32 %v384, %v414
        %v417 = vadd.f32 %v385, %v415
        %418 = vrot.lane.b32.xlu0 %v255, 46
        %v419 = vpop.permute.xlu0 %418
        %420 = vrot.lane.b32.xlu0 %v259, 46
        %v421 = vpop.permute.xlu0 %420
        %422 = vrot.lane.b32.xlu0 %v263, 46
        %v423 = vpop.permute.xlu0 %422
        %vm424 = vcmask 375808
        %v425 = vsel %vm424, %v419, %v421
        %v426 = vsel %vm424, %v421, %v423
        %v429 = vsel %vm237, %v425, 0.0
        %v430 = vsel %vm238, %v426, 0.0
        %s431 = scalar_lea.vmem %s1, 20
        %v432 = vld [vmem:[%s431] sm:$0xf]
        %434 = vset.pattern.permute.xlu0 0
        %435 = vperm.xlu0 %434, %v432
        %v436 = vpop.permute.xlu0 %435
        %v438 = vlaneseq
        %v439 = vshrl.u32 %v438, 7
        %v440 = vsub.s32 0, %v439
        %v441 = vrot.slane %v429, %v440
        %v442 = vlaneseq
        %v443 = vshrl.u32 %v442, 7
        %v444 = vsub.s32 0, %v443
        %v445 = vrot.slane %v430, %v444
        %v446 = vmul.f32 %v436, %v441
        %v447 = vmul.f32 %v436, %v445
        %v448 = vadd.f32 %v416, %v446
        %v449 = vadd.f32 %v417, %v447
        %450 = vrot.lane.b32.xlu0 %v255, 45
        %v451 = vpop.permute.xlu0 %450
        %452 = vrot.lane.b32.xlu0 %v259, 45
        %v453 = vpop.permute.xlu0 %452
        %454 = vrot.lane.b32.xlu0 %v263, 45
        %v455 = vpop.permute.xlu0 %454
        %vm456 = vcmask 367616
        %v457 = vsel %vm456, %v451, %v453
        %v458 = vsel %vm456, %v453, %v455
        %v461 = vsel %vm245, %v457, 0.0
        %v462 = vsel %vm246, %v458, 0.0
        %s463 = scalar_lea.vmem %s1, 24
        %v464 = vld [vmem:[%s463] sm:$0xf]
        %466 = vset.pattern.permute.xlu0 0
        %467 = vperm.xlu0 %466, %v464
        %v468 = vpop.permute.xlu0 %467
        %v470 = vlaneseq
        %v471 = vshrl.u32 %v470, 7
        %v472 = vsub.s32 0, %v471
        %v473 = vrot.slane %v461, %v472
        %v474 = vlaneseq
        %v475 = vshrl.u32 %v474, 7
        %v476 = vsub.s32 0, %v475
        %v477 = vrot.slane %v462, %v476
        %v478 = vmul.f32 %v468, %v473
        %v479 = vmul.f32 %v468, %v477
        %v480 = vadd.f32 %v448, %v478
        %v481 = vadd.f32 %v449, %v479
        %482 = vrot.lane.b32.xlu0 %v255, 35
        %v483 = vpop.permute.xlu0 %482
        %484 = vrot.lane.b32.xlu0 %v259, 35
        %v485 = vpop.permute.xlu0 %484
        %486 = vrot.lane.b32.xlu0 %v263, 35
        %v487 = vpop.permute.xlu0 %486
        %vm488 = vcmask 285696
        %v489 = vsel %vm488, %v483, %v485
        %v490 = vsel %vm488, %v485, %v487
        %v493 = vsel %vm205, %v489, 0.0
        %v494 = vsel %vm206, %v490, 0.0
        %s495 = scalar_lea.vmem %s1, 28
        %v496 = vld [vmem:[%s495] sm:$0xf]
        %498 = vset.pattern.permute.xlu0 0
        %499 = vperm.xlu0 %498, %v496
        %v500 = vpop.permute.xlu0 %499
        %v502 = vlaneseq
        %v503 = vshrl.u32 %v502, 7
        %v504 = vsub.s32 0, %v503
        %v505 = vrot.slane %v493, %v504
        %v506 = vlaneseq
        %v507 = vshrl.u32 %v506, 7
        %v508 = vsub.s32 0, %v507
        %v509 = vrot.slane %v494, %v508
        %v510 = vmul.f32 %v500, %v505
        %v511 = vmul.f32 %v500, %v509
        %v512 = vadd.f32 %v480, %v510
        %v513 = vadd.f32 %v481, %v511
        %514 = vrot.lane.b32.xlu0 %v255, 34
        %v515 = vpop.permute.xlu0 %514
        %516 = vrot.lane.b32.xlu0 %v259, 34
        %v517 = vpop.permute.xlu0 %516
        %518 = vrot.lane.b32.xlu0 %v263, 34
        %v519 = vpop.permute.xlu0 %518
        %vm520 = vcmask 277504
        %v521 = vsel %vm520, %v515, %v517
        %v522 = vsel %vm520, %v517, %v519
        %v525 = vsel %vm213, %v521, 0.0
        %v526 = vsel %vm214, %v522, 0.0
        %s527 = scalar_lea.vmem %s1, 32
        %v528 = vld [vmem:[%s527] sm:$0xf]
        %530 = vset.pattern.permute.xlu0 0
        %531 = vperm.xlu0 %530, %v528
        %v532 = vpop.permute.xlu0 %531
        %v534 = vlaneseq
        %v535 = vshrl.u32 %v534, 7
        %v536 = vsub.s32 0, %v535
        %v537 = vrot.slane %v525, %v536
        %v538 = vlaneseq
        %v539 = vshrl.u32 %v538, 7
        %v540 = vsub.s32 0, %v539
        %v541 = vrot.slane %v526, %v540
        %v542 = vmul.f32 %v532, %v537
        %v543 = vmul.f32 %v532, %v541
        %v544 = vadd.f32 %v512, %v542
        %v545 = vadd.f32 %v513, %v543
        %546 = vrot.lane.b32.xlu0 %v255, 33
        %v547 = vpop.permute.xlu0 %546
        %548 = vrot.lane.b32.xlu0 %v259, 33
        %v549 = vpop.permute.xlu0 %548
        %550 = vrot.lane.b32.xlu0 %v263, 33
        %v551 = vpop.permute.xlu0 %550
        %vm552 = vcmask 269312
        %v553 = vsel %vm552, %v547, %v549
        %v554 = vsel %vm552, %v549, %v551
        %v557 = vsel %vm221, %v553, 0.0
        %v558 = vsel %vm222, %v554, 0.0
        %s559 = scalar_lea.vmem %s1, 36
        %v560 = vld [vmem:[%s559] sm:$0xf]
        %562 = vset.pattern.permute.xlu0 0
        %563 = vperm.xlu0 %562, %v560
        %v564 = vpop.permute.xlu0 %563
        %v566 = vlaneseq
        %v567 = vshrl.u32 %v566, 7
        %v568 = vsub.s32 0, %v567
        %v569 = vrot.slane %v557, %v568
        %v570 = vlaneseq
        %v571 = vshrl.u32 %v570, 7
        %v572 = vsub.s32 0, %v571
        %v573 = vrot.slane %v558, %v572
        %v574 = vmul.f32 %v564, %v569
        %v575 = vmul.f32 %v564, %v573
        %v576 = vadd.f32 %v544, %v574
        %v577 = vadd.f32 %v545, %v575
        %s578 = scalar_lea.vmem %s1, 40
        %v579 = vld [vmem:[%s578] sm:$0xf]
        %581 = vset.pattern.permute.xlu0 0
        %582 = vperm.xlu0 %581, %v579
        %v583 = vpop.permute.xlu0 %582
        %v585 = vmul.f32 %v583, %v255
        %v586 = vmul.f32 %v583, %v259
        %v587 = vmul.f32 %v583, %v263
        %591 = vrot.lane.b32.xlu0 %v585, 32
        %v592 = vpop.permute.xlu0 %591
        %593 = vrot.lane.b32.xlu0 %v586, 32
        %v594 = vpop.permute.xlu0 %593
        %595 = vrot.lane.b32.xlu0 %v587, 32
        %v596 = vpop.permute.xlu0 %595
        %vm597 = vcmask 261120
        %v598 = vsel %vm597, %v592, %v594
        %v599 = vsel %vm597, %v594, %v596
        %v602 = vadd.f32 %v576, %v598
        %v603 = vadd.f32 %v577, %v599
        %604 = vrot.lane.b32.xlu0 %v255, 31
        %v605 = vpop.permute.xlu0 %604
        %606 = vrot.lane.b32.xlu0 %v259, 31
        %v607 = vpop.permute.xlu0 %606
        %608 = vrot.lane.b32.xlu0 %v263, 31
        %v609 = vpop.permute.xlu0 %608
        %vm610 = vcmask 252928
        %v611 = vsel %vm610, %v605, %v607
        %v612 = vsel %vm610, %v607, %v609
        %v615 = vsel %vm229, %v611, 0.0
        %v616 = vsel %vm230, %v612, 0.0
        %s617 = scalar_lea.vmem %s1, 44
        %v618 = vld [vmem:[%s617] sm:$0xf]
        %620 = vset.pattern.permute.xlu0 0
        %621 = vperm.xlu0 %620, %v618
        %v622 = vpop.permute.xlu0 %621
        %v624 = vlaneseq
        %v625 = vshrl.u32 %v624, 7
        %v626 = vsub.s32 0, %v625
        %v627 = vrot.slane %v615, %v626
        %v628 = vlaneseq
        %v629 = vshrl.u32 %v628, 7
        %v630 = vsub.s32 0, %v629
        %v631 = vrot.slane %v616, %v630
        %v632 = vmul.f32 %v622, %v627
        %v633 = vmul.f32 %v622, %v631
        %v634 = vadd.f32 %v602, %v632
        %v635 = vadd.f32 %v603, %v633
        %636 = vrot.lane.b32.xlu0 %v255, 30
        %v637 = vpop.permute.xlu0 %636
        %638 = vrot.lane.b32.xlu0 %v259, 30
        %v639 = vpop.permute.xlu0 %638
        %640 = vrot.lane.b32.xlu0 %v263, 30
        %v641 = vpop.permute.xlu0 %640
        %vm642 = vcmask 244736
        %v643 = vsel %vm642, %v637, %v639
        %v644 = vsel %vm642, %v639, %v641
        %v647 = vsel %vm237, %v643, 0.0
        %v648 = vsel %vm238, %v644, 0.0
        %s649 = scalar_lea.vmem %s1, 48
        %v650 = vld [vmem:[%s649] sm:$0xf]
        %652 = vset.pattern.permute.xlu0 0
        %653 = vperm.xlu0 %652, %v650
        %v654 = vpop.permute.xlu0 %653
        %v656 = vlaneseq
        %v657 = vshrl.u32 %v656, 7
        %v658 = vsub.s32 0, %v657
        %v659 = vrot.slane %v647, %v658
        %v660 = vlaneseq
        %v661 = vshrl.u32 %v660, 7
        %v662 = vsub.s32 0, %v661
        %v663 = vrot.slane %v648, %v662
        %v664 = vmul.f32 %v654, %v659
        %v665 = vmul.f32 %v654, %v663
        %v666 = vadd.f32 %v634, %v664
        %v667 = vadd.f32 %v635, %v665
        %668 = vrot.lane.b32.xlu0 %v255, 29
        %v669 = vpop.permute.xlu0 %668
        %670 = vrot.lane.b32.xlu0 %v259, 29
        %v671 = vpop.permute.xlu0 %670
        %672 = vrot.lane.b32.xlu0 %v263, 29
        %v673 = vpop.permute.xlu0 %672
        %vm674 = vcmask 236544
        %v675 = vsel %vm674, %v669, %v671
        %v676 = vsel %vm674, %v671, %v673
        %v679 = vsel %vm245, %v675, 0.0
        %v680 = vsel %vm246, %v676, 0.0
        %s681 = scalar_lea.vmem %s1, 52
        %v682 = vld [vmem:[%s681] sm:$0xf]
        %684 = vset.pattern.permute.xlu0 0
        %685 = vperm.xlu0 %684, %v682
        %v686 = vpop.permute.xlu0 %685
        %v688 = vlaneseq
        %v689 = vshrl.u32 %v688, 7
        %v690 = vsub.s32 0, %v689
        %v691 = vrot.slane %v679, %v690
        %v692 = vlaneseq
        %v693 = vshrl.u32 %v692, 7
        %v694 = vsub.s32 0, %v693
        %v695 = vrot.slane %v680, %v694
        %v696 = vmul.f32 %v686, %v691
        %v697 = vmul.f32 %v686, %v695
        %v698 = vadd.f32 %v666, %v696
        %v699 = vadd.f32 %v667, %v697
        %700 = vrot.lane.b32.xlu0 %v255, 19
        %v701 = vpop.permute.xlu0 %700
        %702 = vrot.lane.b32.xlu0 %v259, 19
        %v703 = vpop.permute.xlu0 %702
        %704 = vrot.lane.b32.xlu0 %v263, 19
        %v705 = vpop.permute.xlu0 %704
        %vm706 = vcmask 154624
        %v707 = vsel %vm706, %v701, %v703
        %v708 = vsel %vm706, %v703, %v705
        %v711 = vsel %vm205, %v707, 0.0
        %v712 = vsel %vm206, %v708, 0.0
        %s713 = scalar_lea.vmem %s1, 56
        %v714 = vld [vmem:[%s713] sm:$0xf]
        %716 = vset.pattern.permute.xlu0 0
        %717 = vperm.xlu0 %716, %v714
        %v718 = vpop.permute.xlu0 %717
        %v720 = vlaneseq
        %v721 = vshrl.u32 %v720, 7
        %v722 = vsub.s32 0, %v721
        %v723 = vrot.slane %v711, %v722
        %v724 = vlaneseq
        %v725 = vshrl.u32 %v724, 7
        %v726 = vsub.s32 0, %v725
        %v727 = vrot.slane %v712, %v726
        %v728 = vmul.f32 %v718, %v723
        %v729 = vmul.f32 %v718, %v727
        %v730 = vadd.f32 %v698, %v728
        %v731 = vadd.f32 %v699, %v729
        %732 = vrot.lane.b32.xlu0 %v255, 18
        %v733 = vpop.permute.xlu0 %732
        %734 = vrot.lane.b32.xlu0 %v259, 18
        %v735 = vpop.permute.xlu0 %734
        %736 = vrot.lane.b32.xlu0 %v263, 18
        %v737 = vpop.permute.xlu0 %736
        %vm738 = vcmask 146432
        %v739 = vsel %vm738, %v733, %v735
        %v740 = vsel %vm738, %v735, %v737
        %v743 = vsel %vm213, %v739, 0.0
        %v744 = vsel %vm214, %v740, 0.0
        %s745 = scalar_lea.vmem %s1, 60
        %v746 = vld [vmem:[%s745] sm:$0xf]
        %748 = vset.pattern.permute.xlu0 0
        %749 = vperm.xlu0 %748, %v746
        %v750 = vpop.permute.xlu0 %749
        %v752 = vlaneseq
        %v753 = vshrl.u32 %v752, 7
        %v754 = vsub.s32 0, %v753
        %v755 = vrot.slane %v743, %v754
        %v756 = vlaneseq
        %v757 = vshrl.u32 %v756, 7
        %v758 = vsub.s32 0, %v757
        %v759 = vrot.slane %v744, %v758
        %v760 = vmul.f32 %v750, %v755
        %v761 = vmul.f32 %v750, %v759
        %v762 = vadd.f32 %v730, %v760
        %v763 = vadd.f32 %v731, %v761
        %764 = vrot.lane.b32.xlu0 %v255, 17
        %v765 = vpop.permute.xlu0 %764
        %766 = vrot.lane.b32.xlu0 %v259, 17
        %v767 = vpop.permute.xlu0 %766
        %768 = vrot.lane.b32.xlu0 %v263, 17
        %v769 = vpop.permute.xlu0 %768
        %vm770 = vcmask 138240
        %v771 = vsel %vm770, %v765, %v767
        %v772 = vsel %vm770, %v767, %v769
        %v775 = vsel %vm221, %v771, 0.0
        %v776 = vsel %vm222, %v772, 0.0
        %s777 = scalar_lea.vmem %s1, 64
        %v778 = vld [vmem:[%s777] sm:$0xf]
        %780 = vset.pattern.permute.xlu0 0
        %781 = vperm.xlu0 %780, %v778
        %v782 = vpop.permute.xlu0 %781
        %v784 = vlaneseq
        %v785 = vshrl.u32 %v784, 7
        %v786 = vsub.s32 0, %v785
        %v787 = vrot.slane %v775, %v786
        %v788 = vlaneseq
        %v789 = vshrl.u32 %v788, 7
        %v790 = vsub.s32 0, %v789
        %v791 = vrot.slane %v776, %v790
        %v792 = vmul.f32 %v782, %v787
        %v793 = vmul.f32 %v782, %v791
        %v794 = vadd.f32 %v762, %v792
        %v795 = vadd.f32 %v763, %v793
        %s796 = scalar_lea.vmem %s1, 68
        %v797 = vld [vmem:[%s796] sm:$0xf]
        %799 = vset.pattern.permute.xlu0 0
        %800 = vperm.xlu0 %799, %v797
        %v801 = vpop.permute.xlu0 %800
        %v803 = vmul.f32 %v801, %v255
        %v804 = vmul.f32 %v801, %v259
        %v805 = vmul.f32 %v801, %v263
        %809 = vrot.lane.b32.xlu0 %v803, 16
        %v810 = vpop.permute.xlu0 %809
        %811 = vrot.lane.b32.xlu0 %v804, 16
        %v812 = vpop.permute.xlu0 %811
        %813 = vrot.lane.b32.xlu0 %v805, 16
        %v814 = vpop.permute.xlu0 %813
        %vm815 = vcmask 130048
        %v816 = vsel %vm815, %v810, %v812
        %v817 = vsel %vm815, %v812, %v814
        %v820 = vadd.f32 %v794, %v816
        %v821 = vadd.f32 %v795, %v817
        %822 = vrot.lane.b32.xlu0 %v255, 15
        %v823 = vpop.permute.xlu0 %822
        %824 = vrot.lane.b32.xlu0 %v259, 15
        %v825 = vpop.permute.xlu0 %824
        %826 = vrot.lane.b32.xlu0 %v263, 15
        %v827 = vpop.permute.xlu0 %826
        %vm828 = vcmask 121856
        %v829 = vsel %vm828, %v823, %v825
        %v830 = vsel %vm828, %v825, %v827
        %v833 = vsel %vm229, %v829, 0.0
        %v834 = vsel %vm230, %v830, 0.0
        %s835 = scalar_lea.vmem %s1, 72
        %v836 = vld [vmem:[%s835] sm:$0xf]
        %838 = vset.pattern.permute.xlu0 0
        %839 = vperm.xlu0 %838, %v836
        %v840 = vpop.permute.xlu0 %839
        %v842 = vlaneseq
        %v843 = vshrl.u32 %v842, 7
        %v844 = vsub.s32 0, %v843
        %v845 = vrot.slane %v833, %v844
        %v846 = vlaneseq
        %v847 = vshrl.u32 %v846, 7
        %v848 = vsub.s32 0, %v847
        %v849 = vrot.slane %v834, %v848
        %v850 = vmul.f32 %v840, %v845
        %v851 = vmul.f32 %v840, %v849
        %v852 = vadd.f32 %v820, %v850
        %v853 = vadd.f32 %v821, %v851
        %854 = vrot.lane.b32.xlu0 %v255, 14
        %v855 = vpop.permute.xlu0 %854
        %856 = vrot.lane.b32.xlu0 %v259, 14
        %v857 = vpop.permute.xlu0 %856
        %858 = vrot.lane.b32.xlu0 %v263, 14
        %v859 = vpop.permute.xlu0 %858
        %vm860 = vcmask 113664
        %v861 = vsel %vm860, %v855, %v857
        %v862 = vsel %vm860, %v857, %v859
        %v865 = vsel %vm237, %v861, 0.0
        %v866 = vsel %vm238, %v862, 0.0
        %s867 = scalar_lea.vmem %s1, 76
        %v868 = vld [vmem:[%s867] sm:$0xf]
        %870 = vset.pattern.permute.xlu0 0
        %871 = vperm.xlu0 %870, %v868
        %v872 = vpop.permute.xlu0 %871
        %v874 = vlaneseq
        %v875 = vshrl.u32 %v874, 7
        %v876 = vsub.s32 0, %v875
        %v877 = vrot.slane %v865, %v876
        %v878 = vlaneseq
        %v879 = vshrl.u32 %v878, 7
        %v880 = vsub.s32 0, %v879
        %v881 = vrot.slane %v866, %v880
        %v882 = vmul.f32 %v872, %v877
        %v883 = vmul.f32 %v872, %v881
        %v884 = vadd.f32 %v852, %v882
        %v885 = vadd.f32 %v853, %v883
        %886 = vrot.lane.b32.xlu0 %v255, 13
        %v887 = vpop.permute.xlu0 %886
        %888 = vrot.lane.b32.xlu0 %v259, 13
        %v889 = vpop.permute.xlu0 %888
        %890 = vrot.lane.b32.xlu0 %v263, 13
        %v891 = vpop.permute.xlu0 %890
        %vm892 = vcmask 105472
        %v893 = vsel %vm892, %v887, %v889
        %v894 = vsel %vm892, %v889, %v891
        %v897 = vsel %vm245, %v893, 0.0
        %v898 = vsel %vm246, %v894, 0.0
        %s899 = scalar_lea.vmem %s1, 80
        %v900 = vld [vmem:[%s899] sm:$0xf]
        %902 = vset.pattern.permute.xlu0 0
        %903 = vperm.xlu0 %902, %v900
        %v904 = vpop.permute.xlu0 %903
        %v906 = vlaneseq
        %v907 = vshrl.u32 %v906, 7
        %v908 = vsub.s32 0, %v907
        %v909 = vrot.slane %v897, %v908
        %v910 = vlaneseq
        %v911 = vshrl.u32 %v910, 7
        %v912 = vsub.s32 0, %v911
        %v913 = vrot.slane %v898, %v912
        %v914 = vmul.f32 %v904, %v909
        %v915 = vmul.f32 %v904, %v913
        %v916 = vadd.f32 %v884, %v914
        %v917 = vadd.f32 %v885, %v915
        %918 = vrot.lane.b32.xlu0 %v255, 3
        %v919 = vpop.permute.xlu0 %918
        %920 = vrot.lane.b32.xlu0 %v259, 3
        %v921 = vpop.permute.xlu0 %920
        %922 = vrot.lane.b32.xlu0 %v263, 3
        %v923 = vpop.permute.xlu0 %922
        %vm924 = vcmask 23552
        %v925 = vsel %vm924, %v919, %v921
        %v926 = vsel %vm924, %v921, %v923
        %v929 = vsel %vm205, %v925, 0.0
        %v930 = vsel %vm206, %v926, 0.0
        %s931 = scalar_lea.vmem %s1, 84
        %v932 = vld [vmem:[%s931] sm:$0xf]
        %934 = vset.pattern.permute.xlu0 0
        %935 = vperm.xlu0 %934, %v932
        %v936 = vpop.permute.xlu0 %935
        %v938 = vlaneseq
        %v939 = vshrl.u32 %v938, 7
        %v940 = vsub.s32 0, %v939
        %v941 = vrot.slane %v929, %v940
        %v942 = vlaneseq
        %v943 = vshrl.u32 %v942, 7
        %v944 = vsub.s32 0, %v943
        %v945 = vrot.slane %v930, %v944
        %v946 = vmul.f32 %v936, %v941
        %v947 = vmul.f32 %v936, %v945
        %v948 = vadd.f32 %v916, %v946
        %v949 = vadd.f32 %v917, %v947
        %950 = vrot.lane.b32.xlu0 %v255, 2
        %v951 = vpop.permute.xlu0 %950
        %952 = vrot.lane.b32.xlu0 %v259, 2
        %v953 = vpop.permute.xlu0 %952
        %954 = vrot.lane.b32.xlu0 %v263, 2
        %v955 = vpop.permute.xlu0 %954
        %vm956 = vcmask 15360
        %v957 = vsel %vm956, %v951, %v953
        %v958 = vsel %vm956, %v953, %v955
        %v961 = vsel %vm213, %v957, 0.0
        %v962 = vsel %vm214, %v958, 0.0
        %s963 = scalar_lea.vmem %s1, 88
        %v964 = vld [vmem:[%s963] sm:$0xf]
        %966 = vset.pattern.permute.xlu0 0
        %967 = vperm.xlu0 %966, %v964
        %v968 = vpop.permute.xlu0 %967
        %v970 = vlaneseq
        %v971 = vshrl.u32 %v970, 7
        %v972 = vsub.s32 0, %v971
        %v973 = vrot.slane %v961, %v972
        %v974 = vlaneseq
        %v975 = vshrl.u32 %v974, 7
        %v976 = vsub.s32 0, %v975
        %v977 = vrot.slane %v962, %v976
        %v978 = vmul.f32 %v968, %v973
        %v979 = vmul.f32 %v968, %v977
        %v980 = vadd.f32 %v948, %v978
        %v981 = vadd.f32 %v949, %v979
        %982 = vrot.lane.b32.xlu0 %v255, 1
        %v983 = vpop.permute.xlu0 %982
        %984 = vrot.lane.b32.xlu0 %v259, 1
        %v985 = vpop.permute.xlu0 %984
        %986 = vrot.lane.b32.xlu0 %v263, 1
        %v987 = vpop.permute.xlu0 %986
        %vm988 = vcmask 7168
        %v989 = vsel %vm988, %v983, %v985
        %v990 = vsel %vm988, %v985, %v987
        %v993 = vsel %vm221, %v989, 0.0
        %v994 = vsel %vm222, %v990, 0.0
        %s995 = scalar_lea.vmem %s1, 92
        %v996 = vld [vmem:[%s995] sm:$0xf]
        %998 = vset.pattern.permute.xlu0 0
        %999 = vperm.xlu0 %998, %v996
        %v1000 = vpop.permute.xlu0 %999
        %v1002 = vlaneseq
        %v1003 = vshrl.u32 %v1002, 7
        %v1004 = vsub.s32 0, %v1003
        %v1005 = vrot.slane %v993, %v1004
        %v1006 = vlaneseq
        %v1007 = vshrl.u32 %v1006, 7
        %v1008 = vsub.s32 0, %v1007
        %v1009 = vrot.slane %v994, %v1008
        %v1010 = vmul.f32 %v1000, %v1005
        %v1011 = vmul.f32 %v1000, %v1009
        %v1012 = vadd.f32 %v980, %v1010
        %v1013 = vadd.f32 %v981, %v1011
        %v1014 = vld [vmem:[#allocation2 + $0x1] sm:$0x3]
        %s1015 = scalar_lea.vmem %s1, 96
        %v1016 = vld [vmem:[%s1015] sm:$0xf]
        %1018 = vset.pattern.permute.xlu0 0
        %1019 = vperm.xlu0 %1018, %v1016
        %v1020 = vpop.permute.xlu0 %1019
        %v1023 = vlaneseq
        %v1024 = vshrl.u32 %v1023, 7
        %v1025 = vsub.s32 0, %v1024
        %v1026 = vrot.slane %v1014, %v1025
        %v1027 = vlaneseq
        %v1028 = vshrl.u32 %v1027, 7
        %v1029 = vsub.s32 1, %v1028
        %v1030 = vrot.slane %v1014, %v1029
        %v1033 = vmul.f32 %v1020, %v1026
        %v1034 = vmul.f32 %v1020, %v1030
        %v1035 = vadd.f32 %v1012, %v1033
        %v1036 = vadd.f32 %v1013, %v1034
        %v1037 = vld [vmem:[#allocation2 + $0x1] sm:$0x7]
        %v1039 = vlaneseq
        %v1040 = vshrl.u32 %v1039, 7
        %v1041 = vsub.s32 0, %v1040
        %v1042 = vrot.slane %v1037, %v1041
        %v1043 = vlaneseq
        %v1044 = vshrl.u32 %v1043, 7
        %v1045 = vsub.s32 1, %v1044
        %v1046 = vrot.slane %v1037, %v1045
        %v1047 = vlaneseq
        %v1048 = vshrl.u32 %v1047, 7
        %v1049 = vsub.s32 2, %v1048
        %v1050 = vrot.slane %v1037, %v1049
        %1051 = vrot.lane.b32.xlu0 %v1042, 127
        %v1052 = vpop.permute.xlu0 %1051
        %1053 = vrot.lane.b32.xlu0 %v1046, 127
        %v1054 = vpop.permute.xlu0 %1053
        %1055 = vrot.lane.b32.xlu0 %v1050, 127
        %v1056 = vpop.permute.xlu0 %1055
        %vm1057 = vcmask 1039360
        %v1058 = vsel %vm1057, %v1052, %v1054
        %v1059 = vsel %vm1057, %v1054, %v1056
        %v1062 = vsel %vm229, %v1058, 0.0
        %v1063 = vsel %vm230, %v1059, 0.0
        %s1064 = scalar_lea.vmem %s1, 100
        %v1065 = vld [vmem:[%s1064] sm:$0xf]
        %1067 = vset.pattern.permute.xlu0 0
        %1068 = vperm.xlu0 %1067, %v1065
        %v1069 = vpop.permute.xlu0 %1068
        %v1071 = vlaneseq
        %v1072 = vshrl.u32 %v1071, 7
        %v1073 = vsub.s32 0, %v1072
        %v1074 = vrot.slane %v1062, %v1073
        %v1075 = vlaneseq
        %v1076 = vshrl.u32 %v1075, 7
        %v1077 = vsub.s32 0, %v1076
        %v1078 = vrot.slane %v1063, %v1077
        %v1079 = vmul.f32 %v1069, %v1074
        %v1080 = vmul.f32 %v1069, %v1078
        %v1081 = vadd.f32 %v1035, %v1079
        %v1082 = vadd.f32 %v1036, %v1080
        %1083 = vrot.lane.b32.xlu0 %v1042, 126
        %v1084 = vpop.permute.xlu0 %1083
        %1085 = vrot.lane.b32.xlu0 %v1046, 126
        %v1086 = vpop.permute.xlu0 %1085
        %1087 = vrot.lane.b32.xlu0 %v1050, 126
        %v1088 = vpop.permute.xlu0 %1087
        %vm1089 = vcmask 1031168
        %v1090 = vsel %vm1089, %v1084, %v1086
        %v1091 = vsel %vm1089, %v1086, %v1088
        %v1094 = vsel %vm237, %v1090, 0.0
        %v1095 = vsel %vm238, %v1091, 0.0
        %s1096 = scalar_lea.vmem %s1, 104
        %v1097 = vld [vmem:[%s1096] sm:$0xf]
        %1099 = vset.pattern.permute.xlu0 0
        %1100 = vperm.xlu0 %1099, %v1097
        %v1101 = vpop.permute.xlu0 %1100
        %v1103 = vlaneseq
        %v1104 = vshrl.u32 %v1103, 7
        %v1105 = vsub.s32 0, %v1104
        %v1106 = vrot.slane %v1094, %v1105
        %v1107 = vlaneseq
        %v1108 = vshrl.u32 %v1107, 7
        %v1109 = vsub.s32 0, %v1108
        %v1110 = vrot.slane %v1095, %v1109
        %v1111 = vmul.f32 %v1101, %v1106
        %v1112 = vmul.f32 %v1101, %v1110
        %v1113 = vadd.f32 %v1081, %v1111
        %v1114 = vadd.f32 %v1082, %v1112
        %1115 = vrot.lane.b32.xlu0 %v1042, 125
        %v1116 = vpop.permute.xlu0 %1115
        %1117 = vrot.lane.b32.xlu0 %v1046, 125
        %v1118 = vpop.permute.xlu0 %1117
        %1119 = vrot.lane.b32.xlu0 %v1050, 125
        %v1120 = vpop.permute.xlu0 %1119
        %vm1121 = vcmask 1022976
        %v1122 = vsel %vm1121, %v1116, %v1118
        %v1123 = vsel %vm1121, %v1118, %v1120
        %v1126 = vsel %vm245, %v1122, 0.0
        %v1127 = vsel %vm246, %v1123, 0.0
        %s1128 = scalar_lea.vmem %s1, 108
        %v1129 = vld [vmem:[%s1128] sm:$0xf]
        %1131 = vset.pattern.permute.xlu0 0
        %1132 = vperm.xlu0 %1131, %v1129
        %v1133 = vpop.permute.xlu0 %1132
        %v1135 = vlaneseq
        %v1136 = vshrl.u32 %v1135, 7
        %v1137 = vsub.s32 0, %v1136
        %v1138 = vrot.slane %v1126, %v1137
        %v1139 = vlaneseq
        %v1140 = vshrl.u32 %v1139, 7
        %v1141 = vsub.s32 0, %v1140
        %v1142 = vrot.slane %v1127, %v1141
        %v1143 = vmul.f32 %v1133, %v1138
        %v1144 = vmul.f32 %v1133, %v1142
        %v1145 = vadd.f32 %v1113, %v1143
        %v1146 = vadd.f32 %v1114, %v1144
        %1147 = vrot.lane.b32.xlu0 %v1042, 115
        %v1148 = vpop.permute.xlu0 %1147
        %1149 = vrot.lane.b32.xlu0 %v1046, 115
        %v1150 = vpop.permute.xlu0 %1149
        %1151 = vrot.lane.b32.xlu0 %v1050, 115
        %v1152 = vpop.permute.xlu0 %1151
        %vm1153 = vcmask 941056
        %v1154 = vsel %vm1153, %v1148, %v1150
        %v1155 = vsel %vm1153, %v1150, %v1152
        %v1158 = vsel %vm205, %v1154, 0.0
        %v1159 = vsel %vm206, %v1155, 0.0
        %s1160 = scalar_lea.vmem %s1, 112
        %v1161 = vld [vmem:[%s1160] sm:$0xf]
        %1163 = vset.pattern.permute.xlu0 0
        %1164 = vperm.xlu0 %1163, %v1161
        %v1165 = vpop.permute.xlu0 %1164
        %v1167 = vlaneseq
        %v1168 = vshrl.u32 %v1167, 7
        %v1169 = vsub.s32 0, %v1168
        %v1170 = vrot.slane %v1158, %v1169
        %v1171 = vlaneseq
        %v1172 = vshrl.u32 %v1171, 7
        %v1173 = vsub.s32 0, %v1172
        %v1174 = vrot.slane %v1159, %v1173
        %v1175 = vmul.f32 %v1165, %v1170
        %v1176 = vmul.f32 %v1165, %v1174
        %v1177 = vadd.f32 %v1145, %v1175
        %v1178 = vadd.f32 %v1146, %v1176
        %1179 = vrot.lane.b32.xlu0 %v1042, 114
        %v1180 = vpop.permute.xlu0 %1179
        %1181 = vrot.lane.b32.xlu0 %v1046, 114
        %v1182 = vpop.permute.xlu0 %1181
        %1183 = vrot.lane.b32.xlu0 %v1050, 114
        %v1184 = vpop.permute.xlu0 %1183
        %vm1185 = vcmask 932864
        %v1186 = vsel %vm1185, %v1180, %v1182
        %v1187 = vsel %vm1185, %v1182, %v1184
        %v1190 = vsel %vm213, %v1186, 0.0
        %v1191 = vsel %vm214, %v1187, 0.0
        %s1192 = scalar_lea.vmem %s1, 116
        %v1193 = vld [vmem:[%s1192] sm:$0xf]
        %1195 = vset.pattern.permute.xlu0 0
        %1196 = vperm.xlu0 %1195, %v1193
        %v1197 = vpop.permute.xlu0 %1196
        %v1199 = vlaneseq
        %v1200 = vshrl.u32 %v1199, 7
        %v1201 = vsub.s32 0, %v1200
        %v1202 = vrot.slane %v1190, %v1201
        %v1203 = vlaneseq
        %v1204 = vshrl.u32 %v1203, 7
        %v1205 = vsub.s32 0, %v1204
        %v1206 = vrot.slane %v1191, %v1205
        %v1207 = vmul.f32 %v1197, %v1202
        %v1208 = vmul.f32 %v1197, %v1206
        %v1209 = vadd.f32 %v1177, %v1207
        %v1210 = vadd.f32 %v1178, %v1208
        %1211 = vrot.lane.b32.xlu0 %v1042, 113
        %v1212 = vpop.permute.xlu0 %1211
        %1213 = vrot.lane.b32.xlu0 %v1046, 113
        %v1214 = vpop.permute.xlu0 %1213
        %1215 = vrot.lane.b32.xlu0 %v1050, 113
        %v1216 = vpop.permute.xlu0 %1215
        %vm1217 = vcmask 924672
        %v1218 = vsel %vm1217, %v1212, %v1214
        %v1219 = vsel %vm1217, %v1214, %v1216
        %v1222 = vsel %vm221, %v1218, 0.0
        %v1223 = vsel %vm222, %v1219, 0.0
        %s1224 = scalar_lea.vmem %s1, 120
        %v1225 = vld [vmem:[%s1224] sm:$0xf]
        %1227 = vset.pattern.permute.xlu0 0
        %1228 = vperm.xlu0 %1227, %v1225
        %v1229 = vpop.permute.xlu0 %1228
        %v1231 = vlaneseq
        %v1232 = vshrl.u32 %v1231, 7
        %v1233 = vsub.s32 0, %v1232
        %v1234 = vrot.slane %v1222, %v1233
        %v1235 = vlaneseq
        %v1236 = vshrl.u32 %v1235, 7
        %v1237 = vsub.s32 0, %v1236
        %v1238 = vrot.slane %v1223, %v1237
        %v1239 = vmul.f32 %v1229, %v1234
        %v1240 = vmul.f32 %v1229, %v1238
        %v1241 = vadd.f32 %v1209, %v1239
        %v1242 = vadd.f32 %v1210, %v1240
        %s1243 = scalar_lea.vmem %s1, 124
        %v1244 = vld [vmem:[%s1243] sm:$0xf]
        %1246 = vset.pattern.permute.xlu0 0
        %1247 = vperm.xlu0 %1246, %v1244
        %v1248 = vpop.permute.xlu0 %1247
        %v1253 = vmul.f32 %v1248, %v1042
        %v1254 = vmul.f32 %v1248, %v1046
        %v1255 = vmul.f32 %v1248, %v1050
        %1259 = vrot.lane.b32.xlu0 %v1253, 112
        %v1260 = vpop.permute.xlu0 %1259
        %1261 = vrot.lane.b32.xlu0 %v1254, 112
        %v1262 = vpop.permute.xlu0 %1261
        %1263 = vrot.lane.b32.xlu0 %v1255, 112
        %v1264 = vpop.permute.xlu0 %1263
        %vm1265 = vcmask 916480
        %v1266 = vsel %vm1265, %v1260, %v1262
        %v1267 = vsel %vm1265, %v1262, %v1264
        %v1270 = vadd.f32 %v1241, %v1266
        %v1271 = vadd.f32 %v1242, %v1267
        %1272 = vrot.lane.b32.xlu0 %v1042, 111
        %v1273 = vpop.permute.xlu0 %1272
        %1274 = vrot.lane.b32.xlu0 %v1046, 111
        %v1275 = vpop.permute.xlu0 %1274
        %1276 = vrot.lane.b32.xlu0 %v1050, 111
        %v1277 = vpop.permute.xlu0 %1276
        %vm1278 = vcmask 908288
        %v1279 = vsel %vm1278, %v1273, %v1275
        %v1280 = vsel %vm1278, %v1275, %v1277
        %v1283 = vsel %vm229, %v1279, 0.0
        %v1284 = vsel %vm230, %v1280, 0.0
        %s1285 = scalar_lea.vmem %s1, 128
        %v1286 = vld [vmem:[%s1285] sm:$0xf]
        %1288 = vset.pattern.permute.xlu0 0
        %1289 = vperm.xlu0 %1288, %v1286
        %v1290 = vpop.permute.xlu0 %1289
        %v1292 = vlaneseq
        %v1293 = vshrl.u32 %v1292, 7
        %v1294 = vsub.s32 0, %v1293
        %v1295 = vrot.slane %v1283, %v1294
        %v1296 = vlaneseq
        %v1297 = vshrl.u32 %v1296, 7
        %v1298 = vsub.s32 0, %v1297
        %v1299 = vrot.slane %v1284, %v1298
        %v1300 = vmul.f32 %v1290, %v1295
        %v1301 = vmul.f32 %v1290, %v1299
        %v1302 = vadd.f32 %v1270, %v1300
        %v1303 = vadd.f32 %v1271, %v1301
        %1304 = vrot.lane.b32.xlu0 %v1042, 110
        %v1305 = vpop.permute.xlu0 %1304
        %1306 = vrot.lane.b32.xlu0 %v1046, 110
        %v1307 = vpop.permute.xlu0 %1306
        %1308 = vrot.lane.b32.xlu0 %v1050, 110
        %v1309 = vpop.permute.xlu0 %1308
        %vm1310 = vcmask 900096
        %v1311 = vsel %vm1310, %v1305, %v1307
        %v1312 = vsel %vm1310, %v1307, %v1309
        %v1315 = vsel %vm237, %v1311, 0.0
        %v1316 = vsel %vm238, %v1312, 0.0
        %s1317 = scalar_lea.vmem %s1, 132
        %v1318 = vld [vmem:[%s1317] sm:$0xf]
        %1320 = vset.pattern.permute.xlu0 0
        %1321 = vperm.xlu0 %1320, %v1318
        %v1322 = vpop.permute.xlu0 %1321
        %v1324 = vlaneseq
        %v1325 = vshrl.u32 %v1324, 7
        %v1326 = vsub.s32 0, %v1325
        %v1327 = vrot.slane %v1315, %v1326
        %v1328 = vlaneseq
        %v1329 = vshrl.u32 %v1328, 7
        %v1330 = vsub.s32 0, %v1329
        %v1331 = vrot.slane %v1316, %v1330
        %v1332 = vmul.f32 %v1322, %v1327
        %v1333 = vmul.f32 %v1322, %v1331
        %v1334 = vadd.f32 %v1302, %v1332
        %v1335 = vadd.f32 %v1303, %v1333
        %1336 = vrot.lane.b32.xlu0 %v1042, 109
        %v1337 = vpop.permute.xlu0 %1336
        %1338 = vrot.lane.b32.xlu0 %v1046, 109
        %v1339 = vpop.permute.xlu0 %1338
        %1340 = vrot.lane.b32.xlu0 %v1050, 109
        %v1341 = vpop.permute.xlu0 %1340
        %vm1342 = vcmask 891904
        %v1343 = vsel %vm1342, %v1337, %v1339
        %v1344 = vsel %vm1342, %v1339, %v1341
        %v1347 = vsel %vm245, %v1343, 0.0
        %v1348 = vsel %vm246, %v1344, 0.0
        %s1349 = scalar_lea.vmem %s1, 136
        %v1350 = vld [vmem:[%s1349] sm:$0xf]
        %1352 = vset.pattern.permute.xlu0 0
        %1353 = vperm.xlu0 %1352, %v1350
        %v1354 = vpop.permute.xlu0 %1353
        %v1356 = vlaneseq
        %v1357 = vshrl.u32 %v1356, 7
        %v1358 = vsub.s32 0, %v1357
        %v1359 = vrot.slane %v1347, %v1358
        %v1360 = vlaneseq
        %v1361 = vshrl.u32 %v1360, 7
        %v1362 = vsub.s32 0, %v1361
        %v1363 = vrot.slane %v1348, %v1362
        %v1364 = vmul.f32 %v1354, %v1359
        %v1365 = vmul.f32 %v1354, %v1363
        %v1366 = vadd.f32 %v1334, %v1364
        %v1367 = vadd.f32 %v1335, %v1365
        %1368 = vrot.lane.b32.xlu0 %v1042, 99
        %v1369 = vpop.permute.xlu0 %1368
        %1370 = vrot.lane.b32.xlu0 %v1046, 99
        %v1371 = vpop.permute.xlu0 %1370
        %1372 = vrot.lane.b32.xlu0 %v1050, 99
        %v1373 = vpop.permute.xlu0 %1372
        %vm1374 = vcmask 809984
        %v1375 = vsel %vm1374, %v1369, %v1371
        %v1376 = vsel %vm1374, %v1371, %v1373
        %v1379 = vsel %vm205, %v1375, 0.0
        %v1380 = vsel %vm206, %v1376, 0.0
        %s1381 = scalar_lea.vmem %s1, 140
        %v1382 = vld [vmem:[%s1381] sm:$0xf]
        %1384 = vset.pattern.permute.xlu0 0
        %1385 = vperm.xlu0 %1384, %v1382
        %v1386 = vpop.permute.xlu0 %1385
        %v1388 = vlaneseq
        %v1389 = vshrl.u32 %v1388, 7
        %v1390 = vsub.s32 0, %v1389
        %v1391 = vrot.slane %v1379, %v1390
        %v1392 = vlaneseq
        %v1393 = vshrl.u32 %v1392, 7
        %v1394 = vsub.s32 0, %v1393
        %v1395 = vrot.slane %v1380, %v1394
        %v1396 = vmul.f32 %v1386, %v1391
        %v1397 = vmul.f32 %v1386, %v1395
        %v1398 = vadd.f32 %v1366, %v1396
        %v1399 = vadd.f32 %v1367, %v1397
        %1400 = vrot.lane.b32.xlu0 %v1042, 98
        %v1401 = vpop.permute.xlu0 %1400
        %1402 = vrot.lane.b32.xlu0 %v1046, 98
        %v1403 = vpop.permute.xlu0 %1402
        %1404 = vrot.lane.b32.xlu0 %v1050, 98
        %v1405 = vpop.permute.xlu0 %1404
        %vm1406 = vcmask 801792
        %v1407 = vsel %vm1406, %v1401, %v1403
        %v1408 = vsel %vm1406, %v1403, %v1405
        %v1411 = vsel %vm213, %v1407, 0.0
        %v1412 = vsel %vm214, %v1408, 0.0
        %s1413 = scalar_lea.vmem %s1, 144
        %v1414 = vld [vmem:[%s1413] sm:$0xf]
        %1416 = vset.pattern.permute.xlu0 0
        %1417 = vperm.xlu0 %1416, %v1414
        %v1418 = vpop.permute.xlu0 %1417
        %v1420 = vlaneseq
        %v1421 = vshrl.u32 %v1420, 7
        %v1422 = vsub.s32 0, %v1421
        %v1423 = vrot.slane %v1411, %v1422
        %v1424 = vlaneseq
        %v1425 = vshrl.u32 %v1424, 7
        %v1426 = vsub.s32 0, %v1425
        %v1427 = vrot.slane %v1412, %v1426
        %v1428 = vmul.f32 %v1418, %v1423
        %v1429 = vmul.f32 %v1418, %v1427
        %v1430 = vadd.f32 %v1398, %v1428
        %v1431 = vadd.f32 %v1399, %v1429
        %1432 = vrot.lane.b32.xlu0 %v1042, 97
        %v1433 = vpop.permute.xlu0 %1432
        %1434 = vrot.lane.b32.xlu0 %v1046, 97
        %v1435 = vpop.permute.xlu0 %1434
        %1436 = vrot.lane.b32.xlu0 %v1050, 97
        %v1437 = vpop.permute.xlu0 %1436
        %vm1438 = vcmask 793600
        %v1439 = vsel %vm1438, %v1433, %v1435
        %v1440 = vsel %vm1438, %v1435, %v1437
        %v1443 = vsel %vm221, %v1439, 0.0
        %v1444 = vsel %vm222, %v1440, 0.0
        %s1445 = scalar_lea.vmem %s1, 148
        %v1446 = vld [vmem:[%s1445] sm:$0xf]
        %1448 = vset.pattern.permute.xlu0 0
        %1449 = vperm.xlu0 %1448, %v1446
        %v1450 = vpop.permute.xlu0 %1449
        %v1452 = vlaneseq
        %v1453 = vshrl.u32 %v1452, 7
        %v1454 = vsub.s32 0, %v1453
        %v1455 = vrot.slane %v1443, %v1454
        %v1456 = vlaneseq
        %v1457 = vshrl.u32 %v1456, 7
        %v1458 = vsub.s32 0, %v1457
        %v1459 = vrot.slane %v1444, %v1458
        %v1460 = vmul.f32 %v1450, %v1455
        %v1461 = vmul.f32 %v1450, %v1459
        %v1462 = vadd.f32 %v1430, %v1460
        %v1463 = vadd.f32 %v1431, %v1461
        %s1464 = scalar_lea.vmem %s1, 152
        %v1465 = vld [vmem:[%s1464] sm:$0xf]
        %1467 = vset.pattern.permute.xlu0 0
        %1468 = vperm.xlu0 %1467, %v1465
        %v1469 = vpop.permute.xlu0 %1468
        %v1471 = vmul.f32 %v1469, %v1042
        %v1472 = vmul.f32 %v1469, %v1046
        %v1473 = vmul.f32 %v1469, %v1050
        %1477 = vrot.lane.b32.xlu0 %v1471, 96
        %v1478 = vpop.permute.xlu0 %1477
        %1479 = vrot.lane.b32.xlu0 %v1472, 96
        %v1480 = vpop.permute.xlu0 %1479
        %1481 = vrot.lane.b32.xlu0 %v1473, 96
        %v1482 = vpop.permute.xlu0 %1481
        %vm1483 = vcmask 785408
        %v1484 = vsel %vm1483, %v1478, %v1480
        %v1485 = vsel %vm1483, %v1480, %v1482
        %v1488 = vadd.f32 %v1462, %v1484
        %v1489 = vadd.f32 %v1463, %v1485
        %1490 = vrot.lane.b32.xlu0 %v1042, 95
        %v1491 = vpop.permute.xlu0 %1490
        %1492 = vrot.lane.b32.xlu0 %v1046, 95
        %v1493 = vpop.permute.xlu0 %1492
        %1494 = vrot.lane.b32.xlu0 %v1050, 95
        %v1495 = vpop.permute.xlu0 %1494
        %vm1496 = vcmask 777216
        %v1497 = vsel %vm1496, %v1491, %v1493
        %v1498 = vsel %vm1496, %v1493, %v1495
        %v1501 = vsel %vm229, %v1497, 0.0
        %v1502 = vsel %vm230, %v1498, 0.0
        %s1503 = scalar_lea.vmem %s1, 156
        %v1504 = vld [vmem:[%s1503] sm:$0xf]
        %1506 = vset.pattern.permute.xlu0 0
        %1507 = vperm.xlu0 %1506, %v1504
        %v1508 = vpop.permute.xlu0 %1507
        %v1510 = vlaneseq
        %v1511 = vshrl.u32 %v1510, 7
        %v1512 = vsub.s32 0, %v1511
        %v1513 = vrot.slane %v1501, %v1512
        %v1514 = vlaneseq
        %v1515 = vshrl.u32 %v1514, 7
        %v1516 = vsub.s32 0, %v1515
        %v1517 = vrot.slane %v1502, %v1516
        %v1518 = vmul.f32 %v1508, %v1513
        %v1519 = vmul.f32 %v1508, %v1517
        %v1520 = vadd.f32 %v1488, %v1518
        %v1521 = vadd.f32 %v1489, %v1519
        %1522 = vrot.lane.b32.xlu0 %v1042, 94
        %v1523 = vpop.permute.xlu0 %1522
        %1524 = vrot.lane.b32.xlu0 %v1046, 94
        %v1525 = vpop.permute.xlu0 %1524
        %1526 = vrot.lane.b32.xlu0 %v1050, 94
        %v1527 = vpop.permute.xlu0 %1526
        %vm1528 = vcmask 769024
        %v1529 = vsel %vm1528, %v1523, %v1525
        %v1530 = vsel %vm1528, %v1525, %v1527
        %v1533 = vsel %vm237, %v1529, 0.0
        %v1534 = vsel %vm238, %v1530, 0.0
        %s1535 = scalar_lea.vmem %s1, 160
        %v1536 = vld [vmem:[%s1535] sm:$0xf]
        %1538 = vset.pattern.permute.xlu0 0
        %1539 = vperm.xlu0 %1538, %v1536
        %v1540 = vpop.permute.xlu0 %1539
        %v1542 = vlaneseq
        %v1543 = vshrl.u32 %v1542, 7
        %v1544 = vsub.s32 0, %v1543
        %v1545 = vrot.slane %v1533, %v1544
        %v1546 = vlaneseq
        %v1547 = vshrl.u32 %v1546, 7
        %v1548 = vsub.s32 0, %v1547
        %v1549 = vrot.slane %v1534, %v1548
        %v1550 = vmul.f32 %v1540, %v1545
        %v1551 = vmul.f32 %v1540, %v1549
        %v1552 = vadd.f32 %v1520, %v1550
        %v1553 = vadd.f32 %v1521, %v1551
        %1554 = vrot.lane.b32.xlu0 %v1042, 93
        %v1555 = vpop.permute.xlu0 %1554
        %1556 = vrot.lane.b32.xlu0 %v1046, 93
        %v1557 = vpop.permute.xlu0 %1556
        %1558 = vrot.lane.b32.xlu0 %v1050, 93
        %v1559 = vpop.permute.xlu0 %1558
        %vm1560 = vcmask 760832
        %v1561 = vsel %vm1560, %v1555, %v1557
        %v1562 = vsel %vm1560, %v1557, %v1559
        %v1565 = vsel %vm245, %v1561, 0.0
        %v1566 = vsel %vm246, %v1562, 0.0
        %s1567 = scalar_lea.vmem %s1, 164
        %v1568 = vld [vmem:[%s1567] sm:$0xf]
        %1570 = vset.pattern.permute.xlu0 0
        %1571 = vperm.xlu0 %1570, %v1568
        %v1572 = vpop.permute.xlu0 %1571
        %v1574 = vlaneseq
        %v1575 = vshrl.u32 %v1574, 7
        %v1576 = vsub.s32 0, %v1575
        %v1577 = vrot.slane %v1565, %v1576
        %v1578 = vlaneseq
        %v1579 = vshrl.u32 %v1578, 7
        %v1580 = vsub.s32 0, %v1579
        %v1581 = vrot.slane %v1566, %v1580
        %v1582 = vmul.f32 %v1572, %v1577
        %v1583 = vmul.f32 %v1572, %v1581
        %v1584 = vadd.f32 %v1552, %v1582
        %v1585 = vadd.f32 %v1553, %v1583
        %1586 = vrot.lane.b32.xlu0 %v1042, 83
        %v1587 = vpop.permute.xlu0 %1586
        %1588 = vrot.lane.b32.xlu0 %v1046, 83
        %v1589 = vpop.permute.xlu0 %1588
        %1590 = vrot.lane.b32.xlu0 %v1050, 83
        %v1591 = vpop.permute.xlu0 %1590
        %vm1592 = vcmask 678912
        %v1593 = vsel %vm1592, %v1587, %v1589
        %v1594 = vsel %vm1592, %v1589, %v1591
        %v1597 = vsel %vm205, %v1593, 0.0
        %v1598 = vsel %vm206, %v1594, 0.0
        %s1599 = scalar_lea.vmem %s1, 168
        %v1600 = vld [vmem:[%s1599] sm:$0xf]
        %1602 = vset.pattern.permute.xlu0 0
        %1603 = vperm.xlu0 %1602, %v1600
        %v1604 = vpop.permute.xlu0 %1603
        %v1606 = vlaneseq
        %v1607 = vshrl.u32 %v1606, 7
        %v1608 = vsub.s32 0, %v1607
        %v1609 = vrot.slane %v1597, %v1608
        %v1610 = vlaneseq
        %v1611 = vshrl.u32 %v1610, 7
        %v1612 = vsub.s32 0, %v1611
        %v1613 = vrot.slane %v1598, %v1612
        %v1614 = vmul.f32 %v1604, %v1609
        %v1615 = vmul.f32 %v1604, %v1613
        %v1616 = vadd.f32 %v1584, %v1614
        %v1617 = vadd.f32 %v1585, %v1615
        %1618 = vrot.lane.b32.xlu0 %v1042, 82
        %v1619 = vpop.permute.xlu0 %1618
        %1620 = vrot.lane.b32.xlu0 %v1046, 82
        %v1621 = vpop.permute.xlu0 %1620
        %1622 = vrot.lane.b32.xlu0 %v1050, 82
        %v1623 = vpop.permute.xlu0 %1622
        %vm1624 = vcmask 670720
        %v1625 = vsel %vm1624, %v1619, %v1621
        %v1626 = vsel %vm1624, %v1621, %v1623
        %v1629 = vsel %vm213, %v1625, 0.0
        %v1630 = vsel %vm214, %v1626, 0.0
        %s1631 = scalar_lea.vmem %s1, 172
        %v1632 = vld [vmem:[%s1631] sm:$0xf]
        %1634 = vset.pattern.permute.xlu0 0
        %1635 = vperm.xlu0 %1634, %v1632
        %v1636 = vpop.permute.xlu0 %1635
        %v1638 = vlaneseq
        %v1639 = vshrl.u32 %v1638, 7
        %v1640 = vsub.s32 0, %v1639
        %v1641 = vrot.slane %v1629, %v1640
        %v1642 = vlaneseq
        %v1643 = vshrl.u32 %v1642, 7
        %v1644 = vsub.s32 0, %v1643
        %v1645 = vrot.slane %v1630, %v1644
        %v1646 = vmul.f32 %v1636, %v1641
        %v1647 = vmul.f32 %v1636, %v1645
        %v1648 = vadd.f32 %v1616, %v1646
        %v1649 = vadd.f32 %v1617, %v1647
        %1650 = vrot.lane.b32.xlu0 %v1042, 81
        %v1651 = vpop.permute.xlu0 %1650
        %1652 = vrot.lane.b32.xlu0 %v1046, 81
        %v1653 = vpop.permute.xlu0 %1652
        %1654 = vrot.lane.b32.xlu0 %v1050, 81
        %v1655 = vpop.permute.xlu0 %1654
        %vm1656 = vcmask 662528
        %v1657 = vsel %vm1656, %v1651, %v1653
        %v1658 = vsel %vm1656, %v1653, %v1655
        %v1661 = vsel %vm221, %v1657, 0.0
        %v1662 = vsel %vm222, %v1658, 0.0
        %s1663 = scalar_lea.vmem %s1, 176
        %v1664 = vld [vmem:[%s1663] sm:$0xf]
        %1666 = vset.pattern.permute.xlu0 0
        %1667 = vperm.xlu0 %1666, %v1664
        %v1668 = vpop.permute.xlu0 %1667
        %v1670 = vlaneseq
        %v1671 = vshrl.u32 %v1670, 7
        %v1672 = vsub.s32 0, %v1671
        %v1673 = vrot.slane %v1661, %v1672
        %v1674 = vlaneseq
        %v1675 = vshrl.u32 %v1674, 7
        %v1676 = vsub.s32 0, %v1675
        %v1677 = vrot.slane %v1662, %v1676
        %v1678 = vmul.f32 %v1668, %v1673
        %v1679 = vmul.f32 %v1668, %v1677
        %v1680 = vadd.f32 %v1648, %v1678
        %v1681 = vadd.f32 %v1649, %v1679
        %s1682 = scalar_lea.vmem %s1, 180
        %v1683 = vld [vmem:[%s1682] sm:$0xf]
        %1685 = vset.pattern.permute.xlu0 0
        %1686 = vperm.xlu0 %1685, %v1683
        %v1687 = vpop.permute.xlu0 %1686
        %v1689 = vmul.f32 %v1687, %v1042
        %v1690 = vmul.f32 %v1687, %v1046
        %v1691 = vmul.f32 %v1687, %v1050
        %1695 = vrot.lane.b32.xlu0 %v1689, 80
        %v1696 = vpop.permute.xlu0 %1695
        %1697 = vrot.lane.b32.xlu0 %v1690, 80
        %v1698 = vpop.permute.xlu0 %1697
        %1699 = vrot.lane.b32.xlu0 %v1691, 80
        %v1700 = vpop.permute.xlu0 %1699
        %vm1701 = vcmask 654336
        %v1702 = vsel %vm1701, %v1696, %v1698
        %v1703 = vsel %vm1701, %v1698, %v1700
        %v1706 = vadd.f32 %v1680, %v1702
        %v1707 = vadd.f32 %v1681, %v1703
        %1708 = vrot.lane.b32.xlu0 %v1042, 79
        %v1709 = vpop.permute.xlu0 %1708
        %1710 = vrot.lane.b32.xlu0 %v1046, 79
        %v1711 = vpop.permute.xlu0 %1710
        %1712 = vrot.lane.b32.xlu0 %v1050, 79
        %v1713 = vpop.permute.xlu0 %1712
        %vm1714 = vcmask 646144
        %v1715 = vsel %vm1714, %v1709, %v1711
        %v1716 = vsel %vm1714, %v1711, %v1713
        %v1719 = vsel %vm229, %v1715, 0.0
        %v1720 = vsel %vm230, %v1716, 0.0
        %s1721 = scalar_lea.vmem %s1, 184
        %v1722 = vld [vmem:[%s1721] sm:$0xf]
        %1724 = vset.pattern.permute.xlu0 0
        %1725 = vperm.xlu0 %1724, %v1722
        %v1726 = vpop.permute.xlu0 %1725
        %v1728 = vlaneseq
        %v1729 = vshrl.u32 %v1728, 7
        %v1730 = vsub.s32 0, %v1729
        %v1731 = vrot.slane %v1719, %v1730
        %v1732 = vlaneseq
        %v1733 = vshrl.u32 %v1732, 7
        %v1734 = vsub.s32 0, %v1733
        %v1735 = vrot.slane %v1720, %v1734
        %v1736 = vmul.f32 %v1726, %v1731
        %v1737 = vmul.f32 %v1726, %v1735
        %v1738 = vadd.f32 %v1706, %v1736
        %v1739 = vadd.f32 %v1707, %v1737
        %1740 = vrot.lane.b32.xlu0 %v1042, 78
        %v1741 = vpop.permute.xlu0 %1740
        %1742 = vrot.lane.b32.xlu0 %v1046, 78
        %v1743 = vpop.permute.xlu0 %1742
        %1744 = vrot.lane.b32.xlu0 %v1050, 78
        %v1745 = vpop.permute.xlu0 %1744
        %vm1746 = vcmask 637952
        %v1747 = vsel %vm1746, %v1741, %v1743
        %v1748 = vsel %vm1746, %v1743, %v1745
        %v1751 = vsel %vm237, %v1747, 0.0
        %v1752 = vsel %vm238, %v1748, 0.0
        %s1753 = scalar_lea.vmem %s1, 188
        %v1754 = vld [vmem:[%s1753] sm:$0xf]
        %1756 = vset.pattern.permute.xlu0 0
        %1757 = vperm.xlu0 %1756, %v1754
        %v1758 = vpop.permute.xlu0 %1757
        %v1760 = vlaneseq
        %v1761 = vshrl.u32 %v1760, 7
        %v1762 = vsub.s32 0, %v1761
        %v1763 = vrot.slane %v1751, %v1762
        %v1764 = vlaneseq
        %v1765 = vshrl.u32 %v1764, 7
        %v1766 = vsub.s32 0, %v1765
        %v1767 = vrot.slane %v1752, %v1766
        %v1768 = vmul.f32 %v1758, %v1763
        %v1769 = vmul.f32 %v1758, %v1767
        %v1770 = vadd.f32 %v1738, %v1768
        %v1771 = vadd.f32 %v1739, %v1769
        %1772 = vrot.lane.b32.xlu0 %v1042, 77
        %v1773 = vpop.permute.xlu0 %1772
        %1774 = vrot.lane.b32.xlu0 %v1046, 77
        %v1775 = vpop.permute.xlu0 %1774
        %1776 = vrot.lane.b32.xlu0 %v1050, 77
        %v1777 = vpop.permute.xlu0 %1776
        %vm1778 = vcmask 629760
        %v1779 = vsel %vm1778, %v1773, %v1775
        %v1780 = vsel %vm1778, %v1775, %v1777
        %v1783 = vsel %vm245, %v1779, 0.0
        %v1784 = vsel %vm246, %v1780, 0.0
        %s1785 = scalar_lea.vmem %s1, 192
        %v1786 = vld [vmem:[%s1785] sm:$0xf]
        %1788 = vset.pattern.permute.xlu0 0
        %1789 = vperm.xlu0 %1788, %v1786
        %v1790 = vpop.permute.xlu0 %1789
        %v1792 = vlaneseq
        %v1793 = vshrl.u32 %v1792, 7
        %v1794 = vsub.s32 0, %v1793
        %v1795 = vrot.slane %v1783, %v1794
        %v1796 = vlaneseq
        %v1797 = vshrl.u32 %v1796, 7
        %v1798 = vsub.s32 0, %v1797
        %v1799 = vrot.slane %v1784, %v1798
        %v1800 = vmul.f32 %v1790, %v1795
        %v1801 = vmul.f32 %v1790, %v1799
        %v1802 = vadd.f32 %v1770, %v1800
        %v1803 = vadd.f32 %v1771, %v1801
        %v1804 = vld [vmem:[%s2] sm:$0xf]
        %1806 = vset.pattern.permute.xlu0 0
        %1807 = vperm.xlu0 %1806, %v1804
        %v1808 = vpop.permute.xlu0 %1807
        %v1810 = vadd.f32 %v1802, %v1808
        %v1811 = vadd.f32 %v1803, %v1808
        %v1814 = vcombine.low %v1810, %v1811
        %1816 = vst [vmem:[%s161] sm:$0xff] %v1814
        %s1817 = sand.u32 %s93, 1
        %s1818 = scalar_lea.sflag [#allocation4], %s1817
        %s1819 = sand.u32 %s93, 1
        %s1820 = smul.addr %s1819, 8
        %s1821 = scalar_lea.vmem [#allocation3], %s1820
        // Predicated region
        $region33: #{tpu_custom_call.1} parent=31 // pred_check
          %p1822 = pneg %p103
        $region34: #{tpu_custom_call.1} parent=31 // pred_check_branch
          %1824 = sbr.rel (%p1822) target = $region36
        $region35: #{tpu_custom_call.1} parent=31 // pred_region
          %s1826 = ssub.s32 128, 128
          %1827 = vsyncadd %s1818, %s1826
          %s1828 = smul.addr %s17, 2
          %s1829 = smul.addr %s1828, 64
          %s1830 = scalar_lea.hbm %s3, %s1829
          %s1832 = sshll.u32 %s1821, 4
          %s1833 = int_to_ptr.vmem [resolvable:$true] %s1832
          %1835 = dma.vmem_to_hbm [thread:$0]  %s1833, 128, %s1830, %s1818
        $region36: #{tpu_custom_call.1} parent=31 // pred_fallthru
          _
      $region32: #{tpu_custom_call.1} parent=5 // pred_fallthru
        _
      %p1836 = scmp.le.s32.totalorder 2, %s12
      // Predicated region
      $region37: #{tpu_custom_call.1} parent=5 // pred_check
        %p1837 = pneg %p1836
      $region38: #{tpu_custom_call.1} parent=5 // pred_check_branch
        %1839 = sbr.rel (%p1837) target = $region40
      $region39: #{tpu_custom_call.1} parent=5 // pred_region
        %s1840 = ssub.s32 %s12, 2
        // Predicated region
        $region41: #{tpu_custom_call.1} parent=39 // pred_check
          %p1841 = pneg %p109
        $region42: #{tpu_custom_call.1} parent=39 // pred_check_branch
          %1843 = sbr.rel (%p1841) target = $region44
        $region43: #{tpu_custom_call.1} parent=39 // pred_region
          %s1844 = sand.u32 %s94, 1
          %s1845 = scalar_lea.sflag [#allocation4], %s1844
          %s1846 = sand.u32 %s94, 1
          %s1847 = smul.addr %s1846, 8
          %s1848 = scalar_lea.vmem [#allocation3], %s1847
          %1849 = dma.done %s1845, 128
        $region44: #{tpu_custom_call.1} parent=39 // pred_fallthru
          _
      $region40: #{tpu_custom_call.1} parent=5 // pred_fallthru
        _
    $region6: #{tpu_custom_call.1} parent=1 // loop_footer
      %s16 = sadd.s32 1, %s12
    $region7: #{tpu_custom_call.1} parent=1 // loop_footer_branch
      %11 = sbr.rel target = $region3
    $region8: #{tpu_custom_call.1} parent=1 // loop_exit
      _
    %1850 = vsyncpa [#allocation4], 1
    %s1851 = scalar_lea.sflag [#allocation4], 1
    %1852 = vsyncpa %s1851, 1

</llo_original>
